<compile_context>
chip_gen: v7x
topology: tpu7x:2x2x1
jax: 0.10.0
libtpu: 0.0.40
codegen_flags: <defaults>
</compile_context>

<pallas_src>
import jax
import jax.numpy as jnp
from jax.experimental import pallas as pl
from jax.experimental.pallas import tpu as pltpu


def pool_project_kernel(x_ref, m_ref, w_ref, b_ref, out_ref, acc_ref, cnt_ref):
    # x_ref:   (TB, LC, D)  token features (bf16 stream)
    # m_ref:   (TB, LC)     raw 0/1 attention mask (bf16)
    # w_ref:   (D, H)       projection weight (f32)
    # b_ref:   (1, H)       projection bias   (f32)
    # out_ref: (TB, H)      pooled & projected output (f32, lane-dense)
    # acc_ref: (TB, 1, D)   f32 masked-sum accumulator (scratch)
    # cnt_ref: (TB, 1)      f32 token-count accumulator (scratch)
    li = pl.program_id(1)

    @pl.when(li == 0)
    def _():
        acc_ref[...] = jnp.zeros_like(acc_ref)
        cnt_ref[...] = jnp.zeros_like(cnt_ref)

    m = m_ref[...]                                    # (TB, LC) bf16, 0/1
    x = x_ref[...]                                    # (TB, LC, D) bf16
    # Masked partial sum over this L chunk on the MXU (bf16 in, f32 acc).
    acc_ref[...] += jnp.einsum(
        "bql,bld->bqd", m[:, None, :], x,
        preferred_element_type=jnp.float32)           # (TB, 1, D)
    # Token counts for this chunk (tiny; exact in f32).
    cnt_ref[...] += jnp.sum(m.astype(jnp.float32), axis=1, keepdims=True)

    @pl.when(li == pl.num_programs(1) - 1)
    def _():
        cnt = cnt_ref[...]                                    # (TB, 1) f32
        inv = 1.0 / jnp.maximum(cnt, 1e-9)                    # clamp(min=1e-9)
        gate = (cnt > 0).astype(jnp.float32)                  # fully-masked row -> 0
        pooled = acc_ref[...][:, 0, :] * inv                  # (TB, D) masked mean
        proj = jnp.dot(pooled, w_ref[...],
                       preferred_element_type=jnp.float32)    # (TB, H), one matmul
        # Gate the bias so fully-masked rows produce exactly 0 (matches reference).
        out_ref[...] = proj + b_ref[...] * gate


def masked_mean_pool_project(x_bf16, mask_bf16, w, b, *, tb=8, lc=128):
    """x_bf16: (B, L, D) bf16 token features, mask_bf16: (B, L) 0/1 bf16,
    w: (D, H) f32, b: (1, H) f32  ->  (B, H) f32 == masked_mean(x @ w + b)."""
    B, L, D = x_bf16.shape
    H = w.shape[1]

    # Batch tile: keep a multiple of 8 (sublane constraint on the (tb, lc)
    # mask block / (tb, H) output block) and, when possible, >= 2 grid steps
    # on the "parallel" axis so both v7x TensorCores get work.
    tb = min(tb, B)
    if B // tb < 2 and B >= 16:
        tb = max(8, (B // 2) // 8 * 8)
    nb = pl.cdiv(B, tb)
    bp = nb * tb

    # Sequence chunk: multiple of 128 (lane constraint on the mask block) or
    # the full L.  Innermost reduction axis => pipelined double-buffered DMA.
    lc = min(lc, L)
    nl = pl.cdiv(L, lc)
    lp = nl * lc

    if bp != B or lp != L:
        x_bf16 = jnp.pad(x_bf16, ((0, bp - B), (0, lp - L), (0, 0)))
        mask_bf16 = jnp.pad(mask_bf16, ((0, bp - B), (0, lp - L)))

    out = pl.pallas_call(
        pool_project_kernel,
        out_shape=jax.ShapeDtypeStruct((bp, H), jnp.float32),
        grid_spec=pltpu.PrefetchScalarGridSpec(
            num_scalar_prefetch=0,
            grid=(nb, nl),                                   # L reduction innermost
            in_specs=[
                pl.BlockSpec((tb, lc, D), lambda i, l: (i, l, 0)),
                pl.BlockSpec((tb, lc), lambda i, l: (i, l)),
                pl.BlockSpec((D, H), lambda i, l: (0, 0)),   # constant -> no re-DMA
                pl.BlockSpec((1, H), lambda i, l: (0, 0)),
            ],
            out_specs=pl.BlockSpec((tb, H), lambda i, l: (i, 0)),
            scratch_shapes=[
                pltpu.VMEM((tb, 1, D), jnp.float32),         # masked-sum accumulator
                pltpu.VMEM((tb, 1), jnp.float32),            # token-count accumulator
            ],
        ),
        compiler_params=pltpu.CompilerParams(
            dimension_semantics=("parallel", "arbitrary"),
            # Toy shapes need far less; re-derive for real roberta tiles
            # (keep double-buffered bf16 x traffic well under 32 MiB on v7x).
            vmem_limit_bytes=32 * 1024 * 1024,
        ),
    )(x_bf16, mask_bf16, w, b)
    return out[:B]


if __name__ == "__main__":
    # Small, lane-friendly shapes: batch=16, seq=256 (2 L-chunks of 128),
    # feature/hidden=128 -> grid (2 parallel, 2 reduction) steps.
    B, L, V, D, H = 16, 256, 64, 128, 128

    key = jax.random.PRNGKey(0)
    k_ids, k_emb, k_w, k_b = jax.random.split(key, 4)

    input_ids = jax.random.randint(k_ids, (B, L), 0, V, dtype=jnp.int32)
    # Varying valid lengths, including fully-masked rows (edge case).
    lengths = jnp.array([L, L // 2, 3, 1, L, 0, 7, L - 5,
                         L // 4, 2, L, 0, 5, L - 1, 96, 200], dtype=jnp.int32)
    attention_mask = (jnp.arange(L)[None, :] < lengths[:, None]).astype(jnp.int32)

    # TODO(synk): the wrapped stsb-roberta-large encoder has no clean in-kernel
    # equivalent; it is replaced by a deterministic synthetic embedding +
    # linear projection producing last_hidden_state of shape (B, L, H).
    emb = 0.02 * jax.random.normal(k_emb, (V, D), dtype=jnp.float32)
    w = 0.02 * jax.random.normal(k_w, (D, H), dtype=jnp.float32)
    b = 0.02 * jax.random.normal(k_b, (1, H), dtype=jnp.float32)

    # Glue (embedding gather) in plain JAX; stream token features + mask as bf16.
    x_bf16 = emb[input_ids].astype(jnp.bfloat16)          # (B, L, D)
    mask_f = attention_mask.astype(jnp.float32)           # (B, L) f32 (reference)
    mask_bf16 = mask_f.astype(jnp.bfloat16)               # (B, L) 0/1 bf16 (kernel)

    pooled = masked_mean_pool_project(x_bf16, mask_bf16, w, b)
    pooled = jax.block_until_ready(pooled)

    # Pure-JAX reference of the PoolModel semantics (project-then-pool), using
    # the same bf16 token features upcast to f32.
    x_f32 = x_bf16.astype(jnp.float32)
    h_ref = jnp.einsum("bld,dh->blh", x_f32, w) + b        # synthetic model output
    m3 = mask_f[..., None]                                 # unsqueeze(-1)
    summed = jnp.sum(h_ref * m3, axis=1)                   # sum over seq
    counts = jnp.clip(jnp.sum(m3, axis=1), 1e-9, None)     # clamp(min=1e-9)
    ref = summed / counts

    assert pooled.shape == (B, H)
    assert jnp.allclose(pooled, ref, atol=1e-5, rtol=1e-4), (
        float(jnp.max(jnp.abs(pooled - ref))))
    print("KERNEL_OK")
</pallas_src>

<mosaic_0001>
module attributes {stable_mosaic.version = 11 : i64} {
  func.func @pool_project_kernel(%arg0: i32, %arg1: i32, %arg2: memref<8x128x128xbf16, #tpu.memory_space<vmem>>, %arg3: memref<8x128xbf16, #tpu.memory_space<vmem>>, %arg4: memref<128x128xf32, #tpu.memory_space<vmem>>, %arg5: memref<1x128xf32, #tpu.memory_space<vmem>>, %arg6: memref<8x128xf32, #tpu.memory_space<vmem>>, %arg7: memref<8x1x128xf32, #tpu.memory_space<vmem>>, %arg8: memref<8x1xf32, #tpu.memory_space<vmem>>) attributes {dimension_semantics = [#tpu.dimension_semantics<parallel>, #tpu.dimension_semantics<arbitrary>], iteration_bounds = array<i64: 2, 2>, scalar_prefetch = 0 : i64, scratch_operands = 2 : i64, tpu.core_type = #tpu.core_type<tc>, window_params = [{transform_indices = @transform_0, window_bounds = array<i64: 8, 128, 128>}, {transform_indices = @transform_1, window_bounds = array<i64: 8, 128>}, {pipeline_mode = #tpu.pipeline_mode<synchronous>, transform_indices = @transform_2, window_bounds = array<i64: 128, 128>}, {pipeline_mode = #tpu.pipeline_mode<synchronous>, transform_indices = @transform_3, window_bounds = array<i64: 1, 128>}, {transform_indices = @transform_4, window_bounds = array<i64: 8, 128>}]} {
    %c0_i32 = arith.constant 0 : i32
    %0 = arith.cmpi eq, %arg1, %c0_i32 : i32
    %1 = arith.extui %0 : i1 to i32
    %c0_i32_0 = arith.constant 0 : i32
    %2 = arith.cmpi ne, %1, %c0_i32_0 : i32
    scf.if %2 {
      %cst_17 = arith.constant 0.000000e+00 : f32
      %19 = vector.broadcast %cst_17 : f32 to vector<8x1x128xf32>
      %c0_18 = arith.constant 0 : index
      %c0_19 = arith.constant 0 : index
      %c0_20 = arith.constant 0 : index
      %20 = vector.load %arg7[%c0_18, %c0_19, %c0_20] : memref<8x1x128xf32, #tpu.memory_space<vmem>>, vector<8x1x128xf32>
      tpu.vector_store %arg7[%c0_18, %c0_19, %c0_20], %19 {strides = array<i32>} : memref<8x1x128xf32, #tpu.memory_space<vmem>>, vector<8x1x128xf32>,
      %cst_21 = arith.constant 0.000000e+00 : f32
      %21 = vector.broadcast %cst_21 : f32 to vector<8x1xf32>
      %c0_22 = arith.constant 0 : index
      %c0_23 = arith.constant 0 : index
      %22 = vector.load %arg8[%c0_22, %c0_23] : memref<8x1xf32, #tpu.memory_space<vmem>>, vector<8x1xf32>
      tpu.vector_store %arg8[%c0_22, %c0_23], %21 {strides = array<i32>} : memref<8x1xf32, #tpu.memory_space<vmem>>, vector<8x1xf32>,
    } else {
    }
    %c0 = arith.constant 0 : index
    %c0_1 = arith.constant 0 : index
    %3 = vector.load %arg3[%c0, %c0_1] : memref<8x128xbf16, #tpu.memory_space<vmem>>, vector<8x128xbf16>
    %c0_2 = arith.constant 0 : index
    %c0_3 = arith.constant 0 : index
    %c0_4 = arith.constant 0 : index
    %4 = vector.load %arg2[%c0_2, %c0_3, %c0_4] : memref<8x128x128xbf16, #tpu.memory_space<vmem>>, vector<8x128x128xbf16>
    %c0_5 = arith.constant 0 : index
    %c0_6 = arith.constant 0 : index
    %c0_7 = arith.constant 0 : index
    %5 = vector.load %arg7[%c0_5, %c0_6, %c0_7] : memref<8x1x128xf32, #tpu.memory_space<vmem>>, vector<8x1x128xf32>
    %6 = vector.shape_cast %3 : vector<8x128xbf16> to vector<8x1x128xbf16>
    "tpu.trace_start"() <{level = 10 : i32, message = "bql,bld->bqd"}> : () -> ()
    %cst = arith.constant dense<0.000000e+00> : vector<8x1x128xf32>
    %7 = tpu.matmul %6, %4, %cst {dimension_numbers = #tpu.dot_dimension_numbers<[2], [1], [1], [2], [0, 0, 0, 1, 1, 2], [0], [0]>} : vector<8x1x128xbf16>, vector<8x128x128xbf16>, vector<8x1x128xf32> -> vector<8x1x128xf32>
    "tpu.trace_stop"() : () -> ()
    %8 = arith.addf %5, %7 : vector<8x1x128xf32>
    %c0_8 = arith.constant 0 : index
    %c0_9 = arith.constant 0 : index
    %c0_10 = arith.constant 0 : index
    %9 = vector.load %arg7[%c0_8, %c0_9, %c0_10] : memref<8x1x128xf32, #tpu.memory_space<vmem>>, vector<8x1x128xf32>
    tpu.vector_store %arg7[%c0_8, %c0_9, %c0_10], %8 {strides = array<i32>} : memref<8x1x128xf32, #tpu.memory_space<vmem>>, vector<8x1x128xf32>,
    %c0_11 = arith.constant 0 : index
    %c0_12 = arith.constant 0 : index
    %10 = vector.load %arg8[%c0_11, %c0_12] : memref<8x1xf32, #tpu.memory_space<vmem>>, vector<8x1xf32>
    %11 = arith.extf %3 : vector<8x128xbf16> to vector<8x128xf32>
    %cst_13 = arith.constant dense<0.000000e+00> : vector<8xf32>
    %12 = vector.multi_reduction <add>, %11, %cst_13 [1] : vector<8x128xf32> to vector<8xf32>
    %13 = vector.shape_cast %12 : vector<8xf32> to vector<8x1xf32>
    %14 = arith.addf %10, %13 : vector<8x1xf32>
    %c0_14 = arith.constant 0 : index
    %c0_15 = arith.constant 0 : index
    %15 = vector.load %arg8[%c0_14, %c0_15] : memref<8x1xf32, #tpu.memory_space<vmem>>, vector<8x1xf32>
    tpu.vector_store %arg8[%c0_14, %c0_15], %14 {strides = array<i32>} : memref<8x1xf32, #tpu.memory_space<vmem>>, vector<8x1xf32>,
    %c1_i32 = arith.constant 1 : i32
    %16 = arith.cmpi eq, %arg1, %c1_i32 : i32
    %17 = arith.extui %16 : i1 to i32
    %c0_i32_16 = arith.constant 0 : i32
    %18 = arith.cmpi ne, %17, %c0_i32_16 : i32
    scf.if %18 {
      %c0_17 = arith.constant 0 : index
      %c0_18 = arith.constant 0 : index
      %19 = vector.load %arg8[%c0_17, %c0_18] : memref<8x1xf32, #tpu.memory_space<vmem>>, vector<8x1xf32>
      %cst_19 = arith.constant 9.99999971E-10 : f32
      %20 = vector.broadcast %cst_19 : f32 to vector<8x1xf32>
      %21 = arith.maximumf %19, %20 : vector<8x1xf32>
      %cst_20 = arith.constant 1.000000e+00 : f32
      %22 = vector.broadcast %cst_20 : f32 to vector<8x1xf32>
      %23 = arith.divf %22, %21 : vector<8x1xf32>
      %cst_21 = arith.constant 0.000000e+00 : f32
      %24 = vector.broadcast %cst_21 : f32 to vector<8x1xf32>
      %25 = arith.cmpf ogt, %19, %24 : vector<8x1xf32>
      %26 = arith.extui %25 : vector<8x1xi1> to vector<8x1xi32>
      %27 = arith.sitofp %26 : vector<8x1xi32> to vector<8x1xf32>
      %c0_22 = arith.constant 0 : index
      %c0_23 = arith.constant 0 : index
      %c0_24 = arith.constant 0 : index
      %28 = vector.load %arg7[%c0_22, %c0_23, %c0_24] : memref<8x1x128xf32, #tpu.memory_space<vmem>>, vector<8x1x128xf32>
      %29 = vector.shape_cast %28 : vector<8x1x128xf32> to vector<8x128xf32>
      %30 = vector.broadcast %23 : vector<8x1xf32> to vector<8x128xf32>
      %31 = arith.mulf %29, %30 : vector<8x128xf32>
      %c0_25 = arith.constant 0 : index
      %c0_26 = arith.constant 0 : index
      %32 = vector.load %arg4[%c0_25, %c0_26] : memref<128x128xf32, #tpu.memory_space<vmem>>, vector<128x128xf32>
      %cst_27 = arith.constant dense<0.000000e+00> : vector<8x128xf32>
      %33 = tpu.matmul %31, %32, %cst_27 {dimension_numbers = #tpu.dot_dimension_numbers<[1], [0], [0], [1], [0, 0, 1, 1], [], []>} : vector<8x128xf32>, vector<128x128xf32>, vector<8x128xf32> -> vector<8x128xf32>
      %c0_28 = arith.constant 0 : index
      %c0_29 = arith.constant 0 : index
      %34 = vector.load %arg5[%c0_28, %c0_29] : memref<1x128xf32, #tpu.memory_space<vmem>>, vector<1x128xf32>
      %35 = vector.broadcast %34 : vector<1x128xf32> to vector<8x128xf32>
      %36 = vector.broadcast %27 : vector<8x1xf32> to vector<8x128xf32>
      %37 = arith.mulf %35, %36 : vector<8x128xf32>
      %38 = arith.addf %33, %37 : vector<8x128xf32>
      %c0_30 = arith.constant 0 : index
      %c0_31 = arith.constant 0 : index
      %39 = vector.load %arg6[%c0_30, %c0_31] : memref<8x128xf32, #tpu.memory_space<vmem>>, vector<8x128xf32>
      tpu.vector_store %arg6[%c0_30, %c0_31], %38 {strides = array<i32>} : memref<8x128xf32, #tpu.memory_space<vmem>>, vector<8x128xf32>,
    } else {
    }
    return
  }
  func.func @transform_0(%arg0: i32, %arg1: i32) -> (i32, i32, i32) {
    %c0_i32 = arith.constant 0 : i32
    %c0_i32_0 = arith.constant 0 : i32
    return %arg0, %arg1, %c0_i32 : i32, i32, i32
  }
  func.func @transform_1(%arg0: i32, %arg1: i32) -> (i32, i32) {
    %c0_i32 = arith.constant 0 : i32
    return %arg0, %arg1 : i32, i32
  }
  func.func @transform_2(%arg0: i32, %arg1: i32) -> (i32, i32) {
    %c0_i32 = arith.constant 0 : i32
    %c0_i32_0 = arith.constant 0 : i32
    %c0_i32_1 = arith.constant 0 : i32
    return %c0_i32, %c0_i32_0 : i32, i32
  }
  func.func @transform_3(%arg0: i32, %arg1: i32) -> (i32, i32) {
    %c0_i32 = arith.constant 0 : i32
    %c0_i32_0 = arith.constant 0 : i32
    %c0_i32_1 = arith.constant 0 : i32
    return %c0_i32, %c0_i32_0 : i32, i32
  }
  func.func @transform_4(%arg0: i32, %arg1: i32) -> (i32, i32) {
    %c0_i32 = arith.constant 0 : i32
    %c0_i32_0 = arith.constant 0 : i32
    return %arg0, %c0_i32 : i32, i32
  }
}

</mosaic_0001>

<llo_original>
// kernel: tpu_custom_call.1
$region0: #{tpu_custom_call.1}
  #allocation0 [shape = 'u32[]', space=smem, size = 0x4, offset = 0x4, fixed_abs, tag = 'smem constant byte address 0x4 - core index']
  #allocation1 [shape = 'u32[144,128]{1,0:T(1,128)}', space=vmem, size = 0x12000, scoped, tag = 'internal scratch']
  #allocation2 [shape = 'f32[8,1,128]{2,1,0:T(1,128)}', space=vmem, size = 0x1000, scoped, tag = 'scratch operand']
  #allocation3 [shape = 'f32[8,1]{1,0:T(8,128)}', space=vmem, size = 0x1000, scoped, tag = 'scratch operand']
  #allocation11 [shape = 's32[]', space=sflag, size = 0x4, offset = 0, fixed_abs, tag = 'sflag constant byte address 0x0 - dummy sync flag']
  %s0 = inlined_call_operand.hbm [shape: bf16[16,256,128], index: 0, kind: input, shape index: {}]
  %s1 = inlined_call_operand.hbm [shape: bf16[16,256], index: 1, kind: input, shape index: {}]
  %s2 = inlined_call_operand.hbm [shape: f32[128,128], index: 2, kind: input, shape index: {}]
  %s3 = inlined_call_operand.vmem [shape: f32[1,128], index: 3, kind: input, shape index: {}]
  %s4 = inlined_call_operand.hbm [shape: f32[16,128], index: 4, kind: output, shape index: {}]
  %s5 = sld [smem:[#allocation0]]
  $region69: #{tpu_custom_call.1} parent=0
    _
  %s7 = ssub.s32 1, %s5
  %s8 = scalar_select 0, %s7, %s5
  $region1: #{tpu_custom_call.1} parent=0
    #allocation4 [shape = 'u8[524288]{0}', space=vmem, size = 0x80000, scoped, tag = 'input window, operand 0']
    #allocation5 [shape = 's32[2]{0}', space=sflag, size = 0x8, scoped, tag = 'scoped memory for tpu_custom_call.1']
    #allocation6 [shape = 's32[2]{0}', space=sflag, size = 0x8, scoped, tag = 'scoped memory for tpu_custom_call.1']
    #allocation7 [shape = 'u8[4096]{0}', space=vmem, size = 0x1000, scoped, tag = 'input window, operand 1']
    #allocation8 [shape = 's32[2]{0}', space=sflag, size = 0x8, scoped, tag = 'scoped memory for tpu_custom_call.1']
    #allocation9 [shape = 'u8[65536]{0}', space=vmem, size = 0x10000, scoped, tag = 'input window, operand 2, single buffered']
    #allocation10 [shape = 'u8[8192]{0}', space=vmem, size = 0x2000, scoped, tag = 'output window, operand 0']
    %9 = vsyncpa [#allocation5], 0
    %s10 = scalar_lea.sflag [#allocation5], 1
    %11 = vsyncpa %s10, 0
    %12 = vsyncpa [#allocation8], 0
    %s13 = scalar_lea.sflag [#allocation8], 1
    %14 = vsyncpa %s13, 0
    %15 = vsyncpa [#allocation6], 0
    %s16 = scalar_lea.sflag [#allocation6], 1
    %17 = vsyncpa %s16, 0
    loop: start=0, step=1, limit=6
    $region2: #{tpu_custom_call.1} parent=1 // loop_pre_header
      _
    $region3: #{tpu_custom_call.1} parent=1 // loop_header
      %s19 = sphi 0, %s23
      %p20 = scmp.ge.s32.totalorder %s19, 6
      %s26 = sphi 0, %s38
      %s27 = sphi 0, %s34
      %s28 = sphi 0, %s26
      %s29 = sphi 0, %s27
      %s30 = sphi 0, %s28
      %s31 = sphi 0, %s29
      %s43 = sphi 0, %s45
      %s46 = sphi 0, %s43
      %s47 = sphi 0, %s46
      %s63 = sphi 0, %s47
      %s71 = sphi 0, %s73
      %s74 = sphi 0, %s71
      %s75 = sphi 0, %s74
      %s91 = sphi 0, %s75
      %s95 = sphi 0, %s95
      %s97 = sphi 0, %s95
      %s98 = sphi 0, %s97
      %s112 = sphi 0, %s98
      %s116 = sphi 0, %s116
      %s118 = sphi 0, %s116
      %s119 = sphi 0, %s118
      %s133 = sphi 0, %s119
      %s139 = sphi 0, %s141
      %s142 = sphi 0, %s139
      %s143 = sphi 0, %s142
      %s159 = sphi 0, %s143
    $region4: #{tpu_custom_call.1} parent=1 // loop_header_branch
      %22 = sbr.rel (%p20) target = $region8
    $region5: #{tpu_custom_call.1} parent=1 // loop_body
      %s24 = ssub.s32 %s19, 1
      %s25 = ssub.s32 %s19, 2
      %s32 = sadd.s32 1, %s27
      %p33 = scmp.ge.s32.totalorder %s32, 2
      %s34 = scalar_select %p33, 0, %s32
      %s35 = sadd.s32 1, %s26
      %s36 = scalar_select %p33, %s35, %s26
      %p37 = scmp.ge.s32.totalorder %s36, 2
      %s38 = scalar_select %p37, 0, %s36
      %s39 = ssub.s32 %s26, %s38
      %s40 = ssub.s32 %s27, %s34
      %s41 = sor.u32 %s39, %s40
      %p42 = scmp.eq.s32.totalorder %s41, 0
      %s44 = sadd.s32 %s43, 1
      %s45 = scalar_select %p42, %s43, %s44
      %p48 = pneg %p42
      %p49 = scmp.eq.s32.totalorder %s19, 3
      %p50 = por %p48, %p49
      %p51 = scmp.ne.s32.totalorder %s43, %s46
      %p52 = scmp.eq.s32.totalorder %s19, 0
      %p53 = por %p51, %p52
      %p54 = scmp.ne.s32.totalorder %s43, %s46
      %p55 = scmp.eq.s32.totalorder %s24, 3
      %p56 = por %p54, %p55
      %p57 = scmp.ne.s32.totalorder %s46, %s47
      %p58 = scmp.eq.s32.totalorder %s24, 0
      %p59 = por %p57, %p58
      %p60 = scmp.ne.s32.totalorder %s46, %s47
      %p61 = scmp.eq.s32.totalorder %s25, 3
      %p62 = por %p60, %p61
      %p64 = scmp.ne.s32.totalorder %s47, %s63
      %p65 = scmp.eq.s32.totalorder %s25, 0
      %p66 = por %p64, %p65
      %s67 = ssub.s32 %s26, %s38
      %s68 = ssub.s32 %s27, %s34
      %s69 = sor.u32 %s67, %s68
      %p70 = scmp.eq.s32.totalorder %s69, 0
      %s72 = sadd.s32 %s71, 1
      %s73 = scalar_select %p70, %s71, %s72
      %p76 = pneg %p70
      %p77 = scmp.eq.s32.totalorder %s19, 3
      %p78 = por %p76, %p77
      %p79 = scmp.ne.s32.totalorder %s71, %s74
      %p80 = scmp.eq.s32.totalorder %s19, 0
      %p81 = por %p79, %p80
      %p82 = scmp.ne.s32.totalorder %s71, %s74
      %p83 = scmp.eq.s32.totalorder %s24, 3
      %p84 = por %p82, %p83
      %p85 = scmp.ne.s32.totalorder %s74, %s75
      %p86 = scmp.eq.s32.totalorder %s24, 0
      %p87 = por %p85, %p86
      %p88 = scmp.ne.s32.totalorder %s74, %s75
      %p89 = scmp.eq.s32.totalorder %s25, 3
      %p90 = por %p88, %p89
      %p92 = scmp.ne.s32.totalorder %s75, %s91
      %p93 = scmp.eq.s32.totalorder %s25, 0
      %p94 = por %p92, %p93
      %s96 = sadd.s32 %s95, 1
      %p99 = scmp.eq.s32.totalorder %s19, 3
      %p100 = scmp.ne.s32.totalorder %s95, %s97
      %p101 = scmp.eq.s32.totalorder %s19, 0
      %p102 = por %p100, %p101
      %p103 = scmp.ne.s32.totalorder %s95, %s97
      %p104 = scmp.eq.s32.totalorder %s24, 3
      %p105 = por %p103, %p104
      %p106 = scmp.ne.s32.totalorder %s97, %s98
      %p107 = scmp.eq.s32.totalorder %s24, 0
      %p108 = por %p106, %p107
      %p109 = scmp.ne.s32.totalorder %s97, %s98
      %p110 = scmp.eq.s32.totalorder %s25, 3
      %p111 = por %p109, %p110
      %p113 = scmp.ne.s32.totalorder %s98, %s112
      %p114 = scmp.eq.s32.totalorder %s25, 0
      %p115 = por %p113, %p114
      %s117 = sadd.s32 %s116, 1
      %p120 = scmp.eq.s32.totalorder %s19, 3
      %p121 = scmp.ne.s32.totalorder %s116, %s118
      %p122 = scmp.eq.s32.totalorder %s19, 0
      %p123 = por %p121, %p122
      %p124 = scmp.ne.s32.totalorder %s116, %s118
      %p125 = scmp.eq.s32.totalorder %s24, 3
      %p126 = por %p124, %p125
      %p127 = scmp.ne.s32.totalorder %s118, %s119
      %p128 = scmp.eq.s32.totalorder %s24, 0
      %p129 = por %p127, %p128
      %p130 = scmp.ne.s32.totalorder %s118, %s119
      %p131 = scmp.eq.s32.totalorder %s25, 3
      %p132 = por %p130, %p131
      %p134 = scmp.ne.s32.totalorder %s119, %s133
      %p135 = scmp.eq.s32.totalorder %s25, 0
      %p136 = por %p134, %p135
      %s137 = ssub.s32 %s26, %s38
      %p138 = scmp.eq.s32.totalorder %s137, 0
      %s140 = sadd.s32 %s139, 1
      %s141 = scalar_select %p138, %s139, %s140
      %p144 = pneg %p138
      %p145 = scmp.eq.s32.totalorder %s19, 3
      %p146 = por %p144, %p145
      %p147 = scmp.ne.s32.totalorder %s139, %s142
      %p148 = scmp.eq.s32.totalorder %s19, 0
      %p149 = por %p147, %p148
      %p150 = scmp.ne.s32.totalorder %s139, %s142
      %p151 = scmp.eq.s32.totalorder %s24, 3
      %p152 = por %p150, %p151
      %p153 = scmp.ne.s32.totalorder %s142, %s143
      %p154 = scmp.eq.s32.totalorder %s24, 0
      %p155 = por %p153, %p154
      %p156 = scmp.ne.s32.totalorder %s142, %s143
      %p157 = scmp.eq.s32.totalorder %s25, 3
      %p158 = por %p156, %p157
      %p160 = scmp.ne.s32.totalorder %s143, %s159
      %p161 = scmp.eq.s32.totalorder %s25, 0
      %p162 = por %p160, %p161
      %p163 = scmp.le.s32.totalorder 1, %s19
      %p164 = scmp.lt.s32.totalorder %s19, 5
      %p165 = pnand %p163, %p164
      %p166 = pneg %p165
      // Predicated region
      $region9: #{tpu_custom_call.1} parent=5 // pred_check
        _
      $region10: #{tpu_custom_call.1} parent=5 // pred_check_branch
        %168 = sbr.rel (%p165) target = $region12
      $region11: #{tpu_custom_call.1} parent=5 // pred_region
        %s169 = ssub.s32 %s19, 1
        // Predicated region
        $region13: #{tpu_custom_call.1} parent=11 // pred_check
          %p170 = pneg %p108
        $region14: #{tpu_custom_call.1} parent=11 // pred_check_branch
          %172 = sbr.rel (%p170) target = $region16
        $region15: #{tpu_custom_call.1} parent=11 // pred_region
          %s174 = ssub.s32 2048, 2048
          %175 = vsyncadd [#allocation8], %s174
          %s176 = sshll.u32 [#allocation9], 4
          %s177 = int_to_ptr.vmem [resolvable:$true] %s176
          %182 = dma.hbm_to_vmem [thread:$0]  %s2, 2048, %s177, [#allocation8], 128, 128, 8
        $region16: #{tpu_custom_call.1} parent=11 // pred_fallthru
          _
        // Predicated region
        $region17: #{tpu_custom_call.1} parent=11 // pred_check
          %p183 = pneg %p129
        $region18: #{tpu_custom_call.1} parent=11 // pred_check_branch
          %185 = sbr.rel (%p183) target = $region20
        $region19: #{tpu_custom_call.1} parent=11 // pred_region
          _
        $region20: #{tpu_custom_call.1} parent=11 // pred_fallthru
          _
      $region12: #{tpu_custom_call.1} parent=5 // pred_fallthru
        _
      %p186 = scmp.lt.s32.totalorder %s19, 4
      // Predicated region
      $region21: #{tpu_custom_call.1} parent=5 // pred_check
        %p187 = pneg %p186
      $region22: #{tpu_custom_call.1} parent=5 // pred_check_branch
        %189 = sbr.rel (%p187) target = $region24
      $region23: #{tpu_custom_call.1} parent=5 // pred_region
        // Predicated region
        $region25: #{tpu_custom_call.1} parent=23 // pred_check
          %p190 = pneg %p53
        $region26: #{tpu_custom_call.1} parent=23 // pred_check_branch
          %192 = sbr.rel (%p190) target = $region28
        $region27: #{tpu_custom_call.1} parent=23 // pred_region
          #allocation12 [shape = 'u32[6]{0}', space=smem, size = 0x18, scoped, tag = 'DMA stride descriptor']
          %s193 = sand.u32 %s43, 1
          %s194 = scalar_lea.sflag [#allocation5], %s193
          %s195 = sand.u32 %s43, 1
          %s196 = smul.addr %s195, 512
          %s197 = scalar_lea.vmem [#allocation4], %s196
          %s198 = smul.u32 8, %s26
          %s199 = smul.u32 16, %s27
          %s201 = ssub.s32 8192, 8192
          %202 = vsyncadd %s194, %s201
          %s203 = smul.addr %s198, 32
          %s204 = sadd.s32 %s199, %s203
          %s205 = smul.addr %s204, 64
          %s206 = scalar_lea.hbm %s0, %s205
          %s208 = sshll.u32 1, 14
          %s209 = sxor.u32 4294967295, %s208
          %s211 = sld [smem:[#allocation0]]
          %s212 = sadd.s32 2, %s211
          %s214 = sshll.u32 7, 26
          %s215 = sxor.u32 4294967295, %s214
          %s216 = sand.u32 0, %s215
          %s217 = sshll.u32 %s212, 26
          %s218 = sor.u32 %s216, %s217
          %s219 = sshll.u32 %s197, 4
          %s220 = int_to_ptr.vmem [resolvable:$true] %s219
          %226 = sst [smem:[#allocation12]] 2048
          %s227 = scalar_lea.smem [#allocation12], 1
          %228 = sst [smem:[%s227]] 1024
          %s229 = scalar_lea.smem [#allocation12], 2
          %230 = sst [smem:[%s229]] 16
          %s231 = scalar_lea.smem [#allocation12], 3
          %232 = sst [smem:[%s231]] 64
          %s233 = scalar_lea.smem [#allocation12], 4
          %234 = sst [smem:[%s233]] 64
          %s235 = scalar_lea.smem [#allocation12], 5
          %236 = sst [smem:[%s235]] 4
          %238 = dma.general %s206, 8192, %s220, %s194, [#allocation11], [#allocation12], %s218, 0
        $region28: #{tpu_custom_call.1} parent=23 // pred_fallthru
          _
        // Predicated region
        $region29: #{tpu_custom_call.1} parent=23 // pred_check
          %p239 = pneg %p81
        $region30: #{tpu_custom_call.1} parent=23 // pred_check_branch
          %241 = sbr.rel (%p239) target = $region32
        $region31: #{tpu_custom_call.1} parent=23 // pred_region
          %s242 = sand.u32 %s19, 1
          %s243 = scalar_lea.sflag [#allocation8], %s242
          %s244 = sand.u32 %s71, 1
          %s245 = smul.addr %s244, 4
          %s246 = scalar_lea.vmem [#allocation7], %s245
          %s248 = ssub.s32 64, 64
          %249 = vsyncadd %s243, %s248
          %s250 = smul.addr %s26, 2
          %s251 = sadd.s32 %s27, %s250
          %s252 = smul.addr %s251, 64
          %s253 = scalar_lea.hbm %s1, %s252
          %s255 = sshll.u32 %s246, 4
          %s256 = int_to_ptr.vmem [resolvable:$true] %s255
          %258 = dma.hbm_to_vmem [thread:$0]  %s253, 64, %s256, %s243
        $region32: #{tpu_custom_call.1} parent=23 // pred_fallthru
          _
      $region24: #{tpu_custom_call.1} parent=5 // pred_fallthru
        _
      %p259 = scmp.le.s32.totalorder 1, %s19
      %p260 = scmp.lt.s32.totalorder %s19, 5
      %p261 = pnand %p259, %p260
      %p262 = pneg %p261
      // Predicated region
      $region33: #{tpu_custom_call.1} parent=5 // pred_check
        _
      $region34: #{tpu_custom_call.1} parent=5 // pred_check_branch
        %264 = sbr.rel (%p261) target = $region36
      $region35: #{tpu_custom_call.1} parent=5 // pred_region
        %s265 = ssub.s32 %s19, 1
        %s266 = sand.u32 %s46, 1
        %s267 = scalar_lea.sflag [#allocation5], %s266
        %s268 = sand.u32 %s46, 1
        %s269 = smul.addr %s268, 512
        %s270 = scalar_lea.vmem [#allocation4], %s269
        // Predicated region
        $region37: #{tpu_custom_call.1} parent=35 // pred_check
          %p271 = pneg %p59
        $region38: #{tpu_custom_call.1} parent=35 // pred_check_branch
          %273 = sbr.rel (%p271) target = $region40
        $region39: #{tpu_custom_call.1} parent=35 // pred_region
          %274 = dma.done %s267, 8192
        $region40: #{tpu_custom_call.1} parent=35 // pred_fallthru
          _
        %s275 = sand.u32 %s24, 1
        %s276 = scalar_lea.sflag [#allocation8], %s275
        %s277 = sand.u32 %s74, 1
        %s278 = smul.addr %s277, 4
        %s279 = scalar_lea.vmem [#allocation7], %s278
        // Predicated region
        $region41: #{tpu_custom_call.1} parent=35 // pred_check
          %p280 = pneg %p87
        $region42: #{tpu_custom_call.1} parent=35 // pred_check_branch
          %282 = sbr.rel (%p280) target = $region44
        $region43: #{tpu_custom_call.1} parent=35 // pred_region
          %283 = dma.done %s276, 64
        $region44: #{tpu_custom_call.1} parent=35 // pred_fallthru
          _
        // Predicated region
        $region45: #{tpu_custom_call.1} parent=35 // pred_check
          %p284 = pneg %p108
        $region46: #{tpu_custom_call.1} parent=35 // pred_check_branch
          %286 = sbr.rel (%p284) target = $region48
        $region47: #{tpu_custom_call.1} parent=35 // pred_region
          %287 = dma.done [#allocation8], 2048
        $region48: #{tpu_custom_call.1} parent=35 // pred_fallthru
          _
        %s288 = sand.u32 %s46, 1
        %s289 = scalar_lea.sflag [#allocation5], %s288
        %s290 = sand.u32 %s46, 1
        %s291 = smul.addr %s290, 512
        %s292 = scalar_lea.vmem [#allocation4], %s291
        %p293 = pneg %p59
        %p294 = pneg %p56
        %s295 = sand.u32 %s24, 1
        %s296 = scalar_lea.sflag [#allocation8], %s295
        %s297 = sand.u32 %s74, 1
        %s298 = smul.addr %s297, 4
        %s299 = scalar_lea.vmem [#allocation7], %s298
        %p300 = pneg %p87
        %p301 = pneg %p84
        %p302 = pneg %p108
        %p303 = pneg %p105
        %p304 = pneg %p129
        %p305 = pneg %p126
        %p306 = pneg %p155
        %p307 = pneg %p152
        %s308 = sand.u32 %s142, 1
        %s309 = scalar_lea.sflag [#allocation6], %s308
        %s310 = sand.u32 %s142, 1
        %s311 = smul.addr %s310, 8
        %s312 = scalar_lea.vmem [#allocation10], %s311
        %s313 = smul.u32 8, %s28
        %s314 = smul.u32 16, %s29
        %p316 = scmp.eq.s32.totalorder %s29, 0
        // Predicated region
        $region49: #{tpu_custom_call.1} parent=35 // pred_check
          %p317 = pneg %p316
        $region50: #{tpu_custom_call.1} parent=35 // pred_check_branch
          %319 = sbr.rel (%p317) target = $region52
        $region51: #{tpu_custom_call.1} parent=35 // pred_region
          %320 = vst [vmem:[#allocation2] sm:$0x1] 0.0
          %321 = vst [vmem:[#allocation2 + $0x1] sm:$0x1] 0.0
          %322 = vst [vmem:[#allocation2 + $0x2] sm:$0x1] 0.0
          %323 = vst [vmem:[#allocation2 + $0x3] sm:$0x1] 0.0
          %324 = vst [vmem:[#allocation2 + $0x4] sm:$0x1] 0.0
          %325 = vst [vmem:[#allocation2 + $0x5] sm:$0x1] 0.0
          %326 = vst [vmem:[#allocation2 + $0x6] sm:$0x1] 0.0
          %327 = vst [vmem:[#allocation2 + $0x7] sm:$0x1] 0.0
          %vm328 = vcmask 7168
          %329 = vst.msk [vmem:[#allocation3] sm:$0xff] %vm328, 0.0
        $region52: #{tpu_custom_call.1} parent=35 // pred_fallthru
          _
        %v330 = vld [vmem:[%s279] sm:$0xf]
        %v331 = vld [vmem:[%s270] sm:$0xf]
        %v332 = vld [vmem:[%s270 + $0x4] sm:$0xf]
        %v333 = vld [vmem:[%s270 + $0x8] sm:$0xf]
        %v334 = vld [vmem:[%s270 + $0xc] sm:$0xf]
        %v335 = vld [vmem:[%s270 + $0x10] sm:$0xf]
        %v336 = vld [vmem:[%s270 + $0x14] sm:$0xf]
        %v337 = vld [vmem:[%s270 + $0x18] sm:$0xf]
        %v338 = vld [vmem:[%s270 + $0x1c] sm:$0xf]
        %v339 = vld [vmem:[%s270 + $0x20] sm:$0xf]
        %v340 = vld [vmem:[%s270 + $0x24] sm:$0xf]
        %v341 = vld [vmem:[%s270 + $0x28] sm:$0xf]
        %v342 = vld [vmem:[%s270 + $0x2c] sm:$0xf]
        %v343 = vld [vmem:[%s270 + $0x30] sm:$0xf]
        %v344 = vld [vmem:[%s270 + $0x34] sm:$0xf]
        %v345 = vld [vmem:[%s270 + $0x38] sm:$0xf]
        %v346 = vld [vmem:[%s270 + $0x3c] sm:$0xf]
        %v347 = vld [vmem:[%s270 + $0x40] sm:$0xf]
        %v348 = vld [vmem:[%s270 + $0x44] sm:$0xf]
        %v349 = vld [vmem:[%s270 + $0x48] sm:$0xf]
        %v350 = vld [vmem:[%s270 + $0x4c] sm:$0xf]
        %v351 = vld [vmem:[%s270 + $0x50] sm:$0xf]
        %v352 = vld [vmem:[%s270 + $0x54] sm:$0xf]
        %v353 = vld [vmem:[%s270 + $0x58] sm:$0xf]
        %v354 = vld [vmem:[%s270 + $0x5c] sm:$0xf]
        %v355 = vld [vmem:[%s270 + $0x60] sm:$0xf]
        %v356 = vld [vmem:[%s270 + $0x64] sm:$0xf]
        %v357 = vld [vmem:[%s270 + $0x68] sm:$0xf]
        %v358 = vld [vmem:[%s270 + $0x6c] sm:$0xf]
        %v359 = vld [vmem:[%s270 + $0x70] sm:$0xf]
        %v360 = vld [vmem:[%s270 + $0x74] sm:$0xf]
        %v361 = vld [vmem:[%s270 + $0x78] sm:$0xf]
        %v362 = vld [vmem:[%s270 + $0x7c] sm:$0xf]
        %v363 = vld [vmem:[%s270 + $0x80] sm:$0xf]
        %v364 = vld [vmem:[%s270 + $0x84] sm:$0xf]
        %v365 = vld [vmem:[%s270 + $0x88] sm:$0xf]
        %v366 = vld [vmem:[%s270 + $0x8c] sm:$0xf]
        %v367 = vld [vmem:[%s270 + $0x90] sm:$0xf]
        %v368 = vld [vmem:[%s270 + $0x94] sm:$0xf]
        %v369 = vld [vmem:[%s270 + $0x98] sm:$0xf]
        %v370 = vld [vmem:[%s270 + $0x9c] sm:$0xf]
        %v371 = vld [vmem:[%s270 + $0xa0] sm:$0xf]
        %v372 = vld [vmem:[%s270 + $0xa4] sm:$0xf]
        %v373 = vld [vmem:[%s270 + $0xa8] sm:$0xf]
        %v374 = vld [vmem:[%s270 + $0xac] sm:$0xf]
        %v375 = vld [vmem:[%s270 + $0xb0] sm:$0xf]
        %v376 = vld [vmem:[%s270 + $0xb4] sm:$0xf]
        %v377 = vld [vmem:[%s270 + $0xb8] sm:$0xf]
        %v378 = vld [vmem:[%s270 + $0xbc] sm:$0xf]
        %v379 = vld [vmem:[%s270 + $0xc0] sm:$0xf]
        %v380 = vld [vmem:[%s270 + $0xc4] sm:$0xf]
        %v381 = vld [vmem:[%s270 + $0xc8] sm:$0xf]
        %v382 = vld [vmem:[%s270 + $0xcc] sm:$0xf]
        %v383 = vld [vmem:[%s270 + $0xd0] sm:$0xf]
        %v384 = vld [vmem:[%s270 + $0xd4] sm:$0xf]
        %v385 = vld [vmem:[%s270 + $0xd8] sm:$0xf]
        %v386 = vld [vmem:[%s270 + $0xdc] sm:$0xf]
        %v387 = vld [vmem:[%s270 + $0xe0] sm:$0xf]
        %v388 = vld [vmem:[%s270 + $0xe4] sm:$0xf]
        %v389 = vld [vmem:[%s270 + $0xe8] sm:$0xf]
        %v390 = vld [vmem:[%s270 + $0xec] sm:$0xf]
        %v391 = vld [vmem:[%s270 + $0xf0] sm:$0xf]
        %v392 = vld [vmem:[%s270 + $0xf4] sm:$0xf]
        %v393 = vld [vmem:[%s270 + $0xf8] sm:$0xf]
        %v394 = vld [vmem:[%s270 + $0xfc] sm:$0xf]
        %v395 = vld [vmem:[%s270 + $0x100] sm:$0xf]
        %v396 = vld [vmem:[%s270 + $0x104] sm:$0xf]
        %v397 = vld [vmem:[%s270 + $0x108] sm:$0xf]
        %v398 = vld [vmem:[%s270 + $0x10c] sm:$0xf]
        %v399 = vld [vmem:[%s270 + $0x110] sm:$0xf]
        %v400 = vld [vmem:[%s270 + $0x114] sm:$0xf]
        %v401 = vld [vmem:[%s270 + $0x118] sm:$0xf]
        %v402 = vld [vmem:[%s270 + $0x11c] sm:$0xf]
        %v403 = vld [vmem:[%s270 + $0x120] sm:$0xf]
        %v404 = vld [vmem:[%s270 + $0x124] sm:$0xf]
        %v405 = vld [vmem:[%s270 + $0x128] sm:$0xf]
        %v406 = vld [vmem:[%s270 + $0x12c] sm:$0xf]
        %v407 = vld [vmem:[%s270 + $0x130] sm:$0xf]
        %v408 = vld [vmem:[%s270 + $0x134] sm:$0xf]
        %v409 = vld [vmem:[%s270 + $0x138] sm:$0xf]
        %v410 = vld [vmem:[%s270 + $0x13c] sm:$0xf]
        %v411 = vld [vmem:[%s270 + $0x140] sm:$0xf]
        %v412 = vld [vmem:[%s270 + $0x144] sm:$0xf]
        %v413 = vld [vmem:[%s270 + $0x148] sm:$0xf]
        %v414 = vld [vmem:[%s270 + $0x14c] sm:$0xf]
        %v415 = vld [vmem:[%s270 + $0x150] sm:$0xf]
        %v416 = vld [vmem:[%s270 + $0x154] sm:$0xf]
        %v417 = vld [vmem:[%s270 + $0x158] sm:$0xf]
        %v418 = vld [vmem:[%s270 + $0x15c] sm:$0xf]
        %v419 = vld [vmem:[%s270 + $0x160] sm:$0xf]
        %v420 = vld [vmem:[%s270 + $0x164] sm:$0xf]
        %v421 = vld [vmem:[%s270 + $0x168] sm:$0xf]
        %v422 = vld [vmem:[%s270 + $0x16c] sm:$0xf]
        %v423 = vld [vmem:[%s270 + $0x170] sm:$0xf]
        %v424 = vld [vmem:[%s270 + $0x174] sm:$0xf]
        %v425 = vld [vmem:[%s270 + $0x178] sm:$0xf]
        %v426 = vld [vmem:[%s270 + $0x17c] sm:$0xf]
        %v427 = vld [vmem:[%s270 + $0x180] sm:$0xf]
        %v428 = vld [vmem:[%s270 + $0x184] sm:$0xf]
        %v429 = vld [vmem:[%s270 + $0x188] sm:$0xf]
        %v430 = vld [vmem:[%s270 + $0x18c] sm:$0xf]
        %v431 = vld [vmem:[%s270 + $0x190] sm:$0xf]
        %v432 = vld [vmem:[%s270 + $0x194] sm:$0xf]
        %v433 = vld [vmem:[%s270 + $0x198] sm:$0xf]
        %v434 = vld [vmem:[%s270 + $0x19c] sm:$0xf]
        %v435 = vld [vmem:[%s270 + $0x1a0] sm:$0xf]
        %v436 = vld [vmem:[%s270 + $0x1a4] sm:$0xf]
        %v437 = vld [vmem:[%s270 + $0x1a8] sm:$0xf]
        %v438 = vld [vmem:[%s270 + $0x1ac] sm:$0xf]
        %v439 = vld [vmem:[%s270 + $0x1b0] sm:$0xf]
        %v440 = vld [vmem:[%s270 + $0x1b4] sm:$0xf]
        %v441 = vld [vmem:[%s270 + $0x1b8] sm:$0xf]
        %v442 = vld [vmem:[%s270 + $0x1bc] sm:$0xf]
        %v443 = vld [vmem:[%s270 + $0x1c0] sm:$0xf]
        %v444 = vld [vmem:[%s270 + $0x1c4] sm:$0xf]
        %v445 = vld [vmem:[%s270 + $0x1c8] sm:$0xf]
        %v446 = vld [vmem:[%s270 + $0x1cc] sm:$0xf]
        %v447 = vld [vmem:[%s270 + $0x1d0] sm:$0xf]
        %v448 = vld [vmem:[%s270 + $0x1d4] sm:$0xf]
        %v449 = vld [vmem:[%s270 + $0x1d8] sm:$0xf]
        %v450 = vld [vmem:[%s270 + $0x1dc] sm:$0xf]
        %v451 = vld [vmem:[%s270 + $0x1e0] sm:$0xf]
        %v452 = vld [vmem:[%s270 + $0x1e4] sm:$0xf]
        %v453 = vld [vmem:[%s270 + $0x1e8] sm:$0xf]
        %v454 = vld [vmem:[%s270 + $0x1ec] sm:$0xf]
        %v455 = vld [vmem:[%s270 + $0x1f0] sm:$0xf]
        %v456 = vld [vmem:[%s270 + $0x1f4] sm:$0xf]
        %v457 = vld [vmem:[%s270 + $0x1f8] sm:$0xf]
        %v458 = vld [vmem:[%s270 + $0x1fc] sm:$0xf]
        %v459 = vld [vmem:[#allocation2] sm:$0x1]
        %v460 = vld [vmem:[#allocation2 + $0x1] sm:$0x1]
        %v461 = vld [vmem:[#allocation2 + $0x2] sm:$0x1]
        %v462 = vld [vmem:[#allocation2 + $0x3] sm:$0x1]
        %v463 = vld [vmem:[#allocation2 + $0x4] sm:$0x1]
        %v464 = vld [vmem:[#allocation2 + $0x5] sm:$0x1]
        %v465 = vld [vmem:[#allocation2 + $0x6] sm:$0x1]
        %v466 = vld [vmem:[#allocation2 + $0x7] sm:$0x1]
        %v469 = vunpack.c.l.s4 1966171168
        %v470 = vunpack.c.0.s8 %v469
        %v471 = vlaneseq
        %v472 = vshrl.u32 %v471, 7
        %v473 = vsub.s32 %v470, %v472
        %v474 = vrot.slane %v330, %v473
        %v475 = vcombine.high %v474, %v474
        %v477 = vunpack.c.l.s4 1966171168
        %v478 = vunpack.c.0.s8 %v477
        %v479 = vlaneseq
        %v480 = vshrl.u32 %v479, 7
        %v481 = vsub.s32 %v478, %v480
        %v482 = vrot.slane %v474, %v481
        %v484 = vunpack.c.l.s4 1966171168
        %v485 = vunpack.c.0.s8 %v484
        %v486 = vlaneseq
        %v487 = vshrl.u32 %v486, 7
        %v488 = vsub.s32 %v485, %v487
        %v489 = vrot.slane %v475, %v488
        %v490 = vcombine.high %v482, %v482
        %v491 = vcombine.high %v489, %v489
        %v492 = vunpack.i.l.s16 %v482
        %v493 = vunpack.i.h.s16 %v482
        %v494 = vunpack.i.l.s16 %v489
        %v495 = vunpack.i.h.s16 %v489
        %v496 = vunpack.i.l.s16 %v490
        %v497 = vunpack.i.h.s16 %v490
        %v498 = vunpack.i.l.s16 %v491
        %v499 = vunpack.i.h.s16 %v491
        %v500 = vpack.i.b16 %v492, %v492
        %v501 = vlaneseq
        %v502 = vshrl.u32 %v501, 7
        %v503 = vsub.s32 0, %v502
        %v504 = vrot.slane %v500, %v503
        %v522 = vunpack.c.l.b16 %v331
        %v523 = vunpack.c.l.b16 %v332
        %v524 = vunpack.c.l.b16 %v333
        %v525 = vunpack.c.l.b16 %v334
        %v526 = vunpack.c.l.b16 %v335
        %v527 = vunpack.c.l.b16 %v336
        %v528 = vunpack.c.l.b16 %v337
        %v529 = vunpack.c.l.b16 %v338
        %v530 = vunpack.c.l.b16 %v339
        %v531 = vunpack.c.l.b16 %v340
        %v532 = vunpack.c.l.b16 %v341
        %v533 = vunpack.c.l.b16 %v342
        %v534 = vunpack.c.l.b16 %v343
        %v535 = vunpack.c.l.b16 %v344
        %v536 = vunpack.c.l.b16 %v345
        %v537 = vunpack.c.l.b16 %v346
        %v538 = vpack.c.b16 %v523, %v522
        %v539 = vpack.c.b16 %v525, %v524
        %v540 = vpack.c.b16 %v527, %v526
        %v541 = vpack.c.b16 %v529, %v528
        %v542 = vpack.c.b16 %v531, %v530
        %v543 = vpack.c.b16 %v533, %v532
        %v544 = vpack.c.b16 %v535, %v534
        %v545 = vpack.c.b16 %v537, %v536
        %554 = vmatprep.subr.bf16.mxu0 0
        %555 = vmatpush1.bf16.msra.mxu0 %v538
        %556 = vmatprep.subr.bf16.mxu0 0
        %557 = vmatpush1.bf16.msra.mxu0 %v539
        %558 = vmatprep.subr.bf16.mxu0 0
        %559 = vmatpush1.bf16.msra.mxu0 %v540
        %560 = vmatprep.subr.bf16.mxu0 0
        %561 = vmatpush1.bf16.msra.mxu0 %v541
        %562 = vmatprep.subr.bf16.mxu0 0
        %563 = vmatpush1.bf16.msra.mxu0 %v542
        %564 = vmatprep.subr.bf16.mxu0 0
        %565 = vmatpush1.bf16.msra.mxu0 %v543
        %566 = vmatprep.subr.bf16.mxu0 0
        %567 = vmatpush1.bf16.msra.mxu0 %v544
        %568 = vmatprep.subr.bf16.mxu0 0
        %569 = vmatpush1.bf16.msra.mxu0 %v545
        %570 = vmatprep.subr.bf16.mxu0 0
        %571 = vmatpush1.bf16.msra.mxu0 0
        %572 = vmatprep.subr.bf16.mxu0 0
        %573 = vmatpush1.bf16.msra.mxu0 0
        %574 = vmatprep.subr.bf16.mxu0 0
        %575 = vmatpush1.bf16.msra.mxu0 0
        %576 = vmatprep.subr.bf16.mxu0 0
        %577 = vmatpush1.bf16.msra.mxu0 0
        %578 = vmatprep.subr.bf16.mxu0 0
        %579 = vmatpush1.bf16.msra.mxu0 0
        %580 = vmatprep.subr.bf16.mxu0 0
        %581 = vmatpush1.bf16.msra.mxu0 0
        %582 = vmatprep.subr.bf16.mxu0 0
        %583 = vmatpush1.bf16.msra.mxu0 0
        %584 = vmatprep.subr.bf16.mxu0 0
        %585 = vmatpush1.bf16.msra.mxu0 0
        %586 = vmatprep.mubr.bf16.mxu0 0
        %587 = vmatmul.mubr.bf16.gmra.mrb[0].mxu0 %v504
        %v588 = vpop.f32.mrb[0].mxu0
        %v589 = vadd.f32 0.0, %v588
        %v590 = vpop.f32.mrb[0].mxu0
        %v591 = vpop.f32.mrb[0].mxu0
        %v592 = vpop.f32.mrb[0].mxu0
        %593 = vdwg.mxu0
        %v594 = vpack.i.b16 %v493, %v493
        %v595 = vlaneseq
        %v596 = vshrl.u32 %v595, 7
        %v597 = vsub.s32 0, %v596
        %v598 = vrot.slane %v594, %v597
        %v616 = vunpack.c.l.b16 %v347
        %v617 = vunpack.c.l.b16 %v348
        %v618 = vunpack.c.l.b16 %v349
        %v619 = vunpack.c.l.b16 %v350
        %v620 = vunpack.c.l.b16 %v351
        %v621 = vunpack.c.l.b16 %v352
        %v622 = vunpack.c.l.b16 %v353
        %v623 = vunpack.c.l.b16 %v354
        %v624 = vunpack.c.l.b16 %v355
        %v625 = vunpack.c.l.b16 %v356
        %v626 = vunpack.c.l.b16 %v357
        %v627 = vunpack.c.l.b16 %v358
        %v628 = vunpack.c.l.b16 %v359
        %v629 = vunpack.c.l.b16 %v360
        %v630 = vunpack.c.l.b16 %v361
        %v631 = vunpack.c.l.b16 %v362
        %v632 = vpack.c.b16 %v617, %v616
        %v633 = vpack.c.b16 %v619, %v618
        %v634 = vpack.c.b16 %v621, %v620
        %v635 = vpack.c.b16 %v623, %v622
        %v636 = vpack.c.b16 %v625, %v624
        %v637 = vpack.c.b16 %v627, %v626
        %v638 = vpack.c.b16 %v629, %v628
        %v639 = vpack.c.b16 %v631, %v630
        %648 = vmatprep.subr.bf16.mxu0 0
        %649 = vmatpush1.bf16.msra.mxu0 %v632
        %650 = vmatprep.subr.bf16.mxu0 0
        %651 = vmatpush1.bf16.msra.mxu0 %v633
        %652 = vmatprep.subr.bf16.mxu0 0
        %653 = vmatpush1.bf16.msra.mxu0 %v634
        %654 = vmatprep.subr.bf16.mxu0 0
        %655 = vmatpush1.bf16.msra.mxu0 %v635
        %656 = vmatprep.subr.bf16.mxu0 0
        %657 = vmatpush1.bf16.msra.mxu0 %v636
        %658 = vmatprep.subr.bf16.mxu0 0
        %659 = vmatpush1.bf16.msra.mxu0 %v637
        %660 = vmatprep.subr.bf16.mxu0 0
        %661 = vmatpush1.bf16.msra.mxu0 %v638
        %662 = vmatprep.subr.bf16.mxu0 0
        %663 = vmatpush1.bf16.msra.mxu0 %v639
        %664 = vmatprep.subr.bf16.mxu0 0
        %665 = vmatpush1.bf16.msra.mxu0 0
        %666 = vmatprep.subr.bf16.mxu0 0
        %667 = vmatpush1.bf16.msra.mxu0 0
        %668 = vmatprep.subr.bf16.mxu0 0
        %669 = vmatpush1.bf16.msra.mxu0 0
        %670 = vmatprep.subr.bf16.mxu0 0
        %671 = vmatpush1.bf16.msra.mxu0 0
        %672 = vmatprep.subr.bf16.mxu0 0
        %673 = vmatpush1.bf16.msra.mxu0 0
        %674 = vmatprep.subr.bf16.mxu0 0
        %675 = vmatpush1.bf16.msra.mxu0 0
        %676 = vmatprep.subr.bf16.mxu0 0
        %677 = vmatpush1.bf16.msra.mxu0 0
        %678 = vmatprep.subr.bf16.mxu0 0
        %679 = vmatpush1.bf16.msra.mxu0 0
        %680 = vmatprep.mubr.bf16.mxu0 0
        %681 = vmatmul.mubr.bf16.gmra.mrb[0].mxu0 %v598
        %v682 = vpop.f32.mrb[0].mxu0
        %v683 = vadd.f32 0.0, %v682
        %v684 = vpop.f32.mrb[0].mxu0
        %v685 = vpop.f32.mrb[0].mxu0
        %v686 = vpop.f32.mrb[0].mxu0
        %687 = vdwg.mxu0
        %v688 = vpack.i.b16 %v494, %v494
        %v689 = vlaneseq
        %v690 = vshrl.u32 %v689, 7
        %v691 = vsub.s32 0, %v690
        %v692 = vrot.slane %v688, %v691
        %v710 = vunpack.c.l.b16 %v363
        %v711 = vunpack.c.l.b16 %v364
        %v712 = vunpack.c.l.b16 %v365
        %v713 = vunpack.c.l.b16 %v366
        %v714 = vunpack.c.l.b16 %v367
        %v715 = vunpack.c.l.b16 %v368
        %v716 = vunpack.c.l.b16 %v369
        %v717 = vunpack.c.l.b16 %v370
        %v718 = vunpack.c.l.b16 %v371
        %v719 = vunpack.c.l.b16 %v372
        %v720 = vunpack.c.l.b16 %v373
        %v721 = vunpack.c.l.b16 %v374
        %v722 = vunpack.c.l.b16 %v375
        %v723 = vunpack.c.l.b16 %v376
        %v724 = vunpack.c.l.b16 %v377
        %v725 = vunpack.c.l.b16 %v378
        %v726 = vpack.c.b16 %v711, %v710
        %v727 = vpack.c.b16 %v713, %v712
        %v728 = vpack.c.b16 %v715, %v714
        %v729 = vpack.c.b16 %v717, %v716
        %v730 = vpack.c.b16 %v719, %v718
        %v731 = vpack.c.b16 %v721, %v720
        %v732 = vpack.c.b16 %v723, %v722
        %v733 = vpack.c.b16 %v725, %v724
        %742 = vmatprep.subr.bf16.mxu0 0
        %743 = vmatpush1.bf16.msra.mxu0 %v726
        %744 = vmatprep.subr.bf16.mxu0 0
        %745 = vmatpush1.bf16.msra.mxu0 %v727
        %746 = vmatprep.subr.bf16.mxu0 0
        %747 = vmatpush1.bf16.msra.mxu0 %v728
        %748 = vmatprep.subr.bf16.mxu0 0
        %749 = vmatpush1.bf16.msra.mxu0 %v729
        %750 = vmatprep.subr.bf16.mxu0 0
        %751 = vmatpush1.bf16.msra.mxu0 %v730
        %752 = vmatprep.subr.bf16.mxu0 0
        %753 = vmatpush1.bf16.msra.mxu0 %v731
        %754 = vmatprep.subr.bf16.mxu0 0
        %755 = vmatpush1.bf16.msra.mxu0 %v732
        %756 = vmatprep.subr.bf16.mxu0 0
        %757 = vmatpush1.bf16.msra.mxu0 %v733
        %758 = vmatprep.subr.bf16.mxu0 0
        %759 = vmatpush1.bf16.msra.mxu0 0
        %760 = vmatprep.subr.bf16.mxu0 0
        %761 = vmatpush1.bf16.msra.mxu0 0
        %762 = vmatprep.subr.bf16.mxu0 0
        %763 = vmatpush1.bf16.msra.mxu0 0
        %764 = vmatprep.subr.bf16.mxu0 0
        %765 = vmatpush1.bf16.msra.mxu0 0
        %766 = vmatprep.subr.bf16.mxu0 0
        %767 = vmatpush1.bf16.msra.mxu0 0
        %768 = vmatprep.subr.bf16.mxu0 0
        %769 = vmatpush1.bf16.msra.mxu0 0
        %770 = vmatprep.subr.bf16.mxu0 0
        %771 = vmatpush1.bf16.msra.mxu0 0
        %772 = vmatprep.subr.bf16.mxu0 0
        %773 = vmatpush1.bf16.msra.mxu0 0
        %774 = vmatprep.mubr.bf16.mxu0 0
        %775 = vmatmul.mubr.bf16.gmra.mrb[0].mxu0 %v692
        %v776 = vpop.f32.mrb[0].mxu0
        %v777 = vadd.f32 0.0, %v776
        %v778 = vpop.f32.mrb[0].mxu0
        %v779 = vpop.f32.mrb[0].mxu0
        %v780 = vpop.f32.mrb[0].mxu0
        %781 = vdwg.mxu0
        %v782 = vpack.i.b16 %v495, %v495
        %v783 = vlaneseq
        %v784 = vshrl.u32 %v783, 7
        %v785 = vsub.s32 0, %v784
        %v786 = vrot.slane %v782, %v785
        %v804 = vunpack.c.l.b16 %v379
        %v805 = vunpack.c.l.b16 %v380
        %v806 = vunpack.c.l.b16 %v381
        %v807 = vunpack.c.l.b16 %v382
        %v808 = vunpack.c.l.b16 %v383
        %v809 = vunpack.c.l.b16 %v384
        %v810 = vunpack.c.l.b16 %v385
        %v811 = vunpack.c.l.b16 %v386
        %v812 = vunpack.c.l.b16 %v387
        %v813 = vunpack.c.l.b16 %v388
        %v814 = vunpack.c.l.b16 %v389
        %v815 = vunpack.c.l.b16 %v390
        %v816 = vunpack.c.l.b16 %v391
        %v817 = vunpack.c.l.b16 %v392
        %v818 = vunpack.c.l.b16 %v393
        %v819 = vunpack.c.l.b16 %v394
        %v820 = vpack.c.b16 %v805, %v804
        %v821 = vpack.c.b16 %v807, %v806
        %v822 = vpack.c.b16 %v809, %v808
        %v823 = vpack.c.b16 %v811, %v810
        %v824 = vpack.c.b16 %v813, %v812
        %v825 = vpack.c.b16 %v815, %v814
        %v826 = vpack.c.b16 %v817, %v816
        %v827 = vpack.c.b16 %v819, %v818
        %836 = vmatprep.subr.bf16.mxu0 0
        %837 = vmatpush1.bf16.msra.mxu0 %v820
        %838 = vmatprep.subr.bf16.mxu0 0
        %839 = vmatpush1.bf16.msra.mxu0 %v821
        %840 = vmatprep.subr.bf16.mxu0 0
        %841 = vmatpush1.bf16.msra.mxu0 %v822
        %842 = vmatprep.subr.bf16.mxu0 0
        %843 = vmatpush1.bf16.msra.mxu0 %v823
        %844 = vmatprep.subr.bf16.mxu0 0
        %845 = vmatpush1.bf16.msra.mxu0 %v824
        %846 = vmatprep.subr.bf16.mxu0 0
        %847 = vmatpush1.bf16.msra.mxu0 %v825
        %848 = vmatprep.subr.bf16.mxu0 0
        %849 = vmatpush1.bf16.msra.mxu0 %v826
        %850 = vmatprep.subr.bf16.mxu0 0
        %851 = vmatpush1.bf16.msra.mxu0 %v827
        %852 = vmatprep.subr.bf16.mxu0 0
        %853 = vmatpush1.bf16.msra.mxu0 0
        %854 = vmatprep.subr.bf16.mxu0 0
        %855 = vmatpush1.bf16.msra.mxu0 0
        %856 = vmatprep.subr.bf16.mxu0 0
        %857 = vmatpush1.bf16.msra.mxu0 0
        %858 = vmatprep.subr.bf16.mxu0 0
        %859 = vmatpush1.bf16.msra.mxu0 0
        %860 = vmatprep.subr.bf16.mxu0 0
        %861 = vmatpush1.bf16.msra.mxu0 0
        %862 = vmatprep.subr.bf16.mxu0 0
        %863 = vmatpush1.bf16.msra.mxu0 0
        %864 = vmatprep.subr.bf16.mxu0 0
        %865 = vmatpush1.bf16.msra.mxu0 0
        %866 = vmatprep.subr.bf16.mxu0 0
        %867 = vmatpush1.bf16.msra.mxu0 0
        %868 = vmatprep.mubr.bf16.mxu0 0
        %869 = vmatmul.mubr.bf16.gmra.mrb[0].mxu0 %v786
        %v870 = vpop.f32.mrb[0].mxu0
        %v871 = vadd.f32 0.0, %v870
        %v872 = vpop.f32.mrb[0].mxu0
        %v873 = vpop.f32.mrb[0].mxu0
        %v874 = vpop.f32.mrb[0].mxu0
        %875 = vdwg.mxu0
        %v876 = vpack.i.b16 %v496, %v496
        %v877 = vlaneseq
        %v878 = vshrl.u32 %v877, 7
        %v879 = vsub.s32 0, %v878
        %v880 = vrot.slane %v876, %v879
        %v898 = vunpack.c.l.b16 %v395
        %v899 = vunpack.c.l.b16 %v396
        %v900 = vunpack.c.l.b16 %v397
        %v901 = vunpack.c.l.b16 %v398
        %v902 = vunpack.c.l.b16 %v399
        %v903 = vunpack.c.l.b16 %v400
        %v904 = vunpack.c.l.b16 %v401
        %v905 = vunpack.c.l.b16 %v402
        %v906 = vunpack.c.l.b16 %v403
        %v907 = vunpack.c.l.b16 %v404
        %v908 = vunpack.c.l.b16 %v405
        %v909 = vunpack.c.l.b16 %v406
        %v910 = vunpack.c.l.b16 %v407
        %v911 = vunpack.c.l.b16 %v408
        %v912 = vunpack.c.l.b16 %v409
        %v913 = vunpack.c.l.b16 %v410
        %v914 = vpack.c.b16 %v899, %v898
        %v915 = vpack.c.b16 %v901, %v900
        %v916 = vpack.c.b16 %v903, %v902
        %v917 = vpack.c.b16 %v905, %v904
        %v918 = vpack.c.b16 %v907, %v906
        %v919 = vpack.c.b16 %v909, %v908
        %v920 = vpack.c.b16 %v911, %v910
        %v921 = vpack.c.b16 %v913, %v912
        %930 = vmatprep.subr.bf16.mxu0 0
        %931 = vmatpush1.bf16.msra.mxu0 %v914
        %932 = vmatprep.subr.bf16.mxu0 0
        %933 = vmatpush1.bf16.msra.mxu0 %v915
        %934 = vmatprep.subr.bf16.mxu0 0
        %935 = vmatpush1.bf16.msra.mxu0 %v916
        %936 = vmatprep.subr.bf16.mxu0 0
        %937 = vmatpush1.bf16.msra.mxu0 %v917
        %938 = vmatprep.subr.bf16.mxu0 0
        %939 = vmatpush1.bf16.msra.mxu0 %v918
        %940 = vmatprep.subr.bf16.mxu0 0
        %941 = vmatpush1.bf16.msra.mxu0 %v919
        %942 = vmatprep.subr.bf16.mxu0 0
        %943 = vmatpush1.bf16.msra.mxu0 %v920
        %944 = vmatprep.subr.bf16.mxu0 0
        %945 = vmatpush1.bf16.msra.mxu0 %v921
        %946 = vmatprep.subr.bf16.mxu0 0
        %947 = vmatpush1.bf16.msra.mxu0 0
        %948 = vmatprep.subr.bf16.mxu0 0
        %949 = vmatpush1.bf16.msra.mxu0 0
        %950 = vmatprep.subr.bf16.mxu0 0
        %951 = vmatpush1.bf16.msra.mxu0 0
        %952 = vmatprep.subr.bf16.mxu0 0
        %953 = vmatpush1.bf16.msra.mxu0 0
        %954 = vmatprep.subr.bf16.mxu0 0
        %955 = vmatpush1.bf16.msra.mxu0 0
        %956 = vmatprep.subr.bf16.mxu0 0
        %957 = vmatpush1.bf16.msra.mxu0 0
        %958 = vmatprep.subr.bf16.mxu0 0
        %959 = vmatpush1.bf16.msra.mxu0 0
        %960 = vmatprep.subr.bf16.mxu0 0
        %961 = vmatpush1.bf16.msra.mxu0 0
        %962 = vmatprep.mubr.bf16.mxu0 0
        %963 = vmatmul.mubr.bf16.gmra.mrb[0].mxu0 %v880
        %v964 = vpop.f32.mrb[0].mxu0
        %v965 = vadd.f32 0.0, %v964
        %v966 = vpop.f32.mrb[0].mxu0
        %v967 = vpop.f32.mrb[0].mxu0
        %v968 = vpop.f32.mrb[0].mxu0
        %969 = vdwg.mxu0
        %v970 = vpack.i.b16 %v497, %v497
        %v971 = vlaneseq
        %v972 = vshrl.u32 %v971, 7
        %v973 = vsub.s32 0, %v972
        %v974 = vrot.slane %v970, %v973
        %v992 = vunpack.c.l.b16 %v411
        %v993 = vunpack.c.l.b16 %v412
        %v994 = vunpack.c.l.b16 %v413
        %v995 = vunpack.c.l.b16 %v414
        %v996 = vunpack.c.l.b16 %v415
        %v997 = vunpack.c.l.b16 %v416
        %v998 = vunpack.c.l.b16 %v417
        %v999 = vunpack.c.l.b16 %v418
        %v1000 = vunpack.c.l.b16 %v419
        %v1001 = vunpack.c.l.b16 %v420
        %v1002 = vunpack.c.l.b16 %v421
        %v1003 = vunpack.c.l.b16 %v422
        %v1004 = vunpack.c.l.b16 %v423
        %v1005 = vunpack.c.l.b16 %v424
        %v1006 = vunpack.c.l.b16 %v425
        %v1007 = vunpack.c.l.b16 %v426
        %v1008 = vpack.c.b16 %v993, %v992
        %v1009 = vpack.c.b16 %v995, %v994
        %v1010 = vpack.c.b16 %v997, %v996
        %v1011 = vpack.c.b16 %v999, %v998
        %v1012 = vpack.c.b16 %v1001, %v1000
        %v1013 = vpack.c.b16 %v1003, %v1002
        %v1014 = vpack.c.b16 %v1005, %v1004
        %v1015 = vpack.c.b16 %v1007, %v1006
        %1024 = vmatprep.subr.bf16.mxu0 0
        %1025 = vmatpush1.bf16.msra.mxu0 %v1008
        %1026 = vmatprep.subr.bf16.mxu0 0
        %1027 = vmatpush1.bf16.msra.mxu0 %v1009
        %1028 = vmatprep.subr.bf16.mxu0 0
        %1029 = vmatpush1.bf16.msra.mxu0 %v1010
        %1030 = vmatprep.subr.bf16.mxu0 0
        %1031 = vmatpush1.bf16.msra.mxu0 %v1011
        %1032 = vmatprep.subr.bf16.mxu0 0
        %1033 = vmatpush1.bf16.msra.mxu0 %v1012
        %1034 = vmatprep.subr.bf16.mxu0 0
        %1035 = vmatpush1.bf16.msra.mxu0 %v1013
        %1036 = vmatprep.subr.bf16.mxu0 0
        %1037 = vmatpush1.bf16.msra.mxu0 %v1014
        %1038 = vmatprep.subr.bf16.mxu0 0
        %1039 = vmatpush1.bf16.msra.mxu0 %v1015
        %1040 = vmatprep.subr.bf16.mxu0 0
        %1041 = vmatpush1.bf16.msra.mxu0 0
        %1042 = vmatprep.subr.bf16.mxu0 0
        %1043 = vmatpush1.bf16.msra.mxu0 0
        %1044 = vmatprep.subr.bf16.mxu0 0
        %1045 = vmatpush1.bf16.msra.mxu0 0
        %1046 = vmatprep.subr.bf16.mxu0 0
        %1047 = vmatpush1.bf16.msra.mxu0 0
        %1048 = vmatprep.subr.bf16.mxu0 0
        %1049 = vmatpush1.bf16.msra.mxu0 0
        %1050 = vmatprep.subr.bf16.mxu0 0
        %1051 = vmatpush1.bf16.msra.mxu0 0
        %1052 = vmatprep.subr.bf16.mxu0 0
        %1053 = vmatpush1.bf16.msra.mxu0 0
        %1054 = vmatprep.subr.bf16.mxu0 0
        %1055 = vmatpush1.bf16.msra.mxu0 0
        %1056 = vmatprep.mubr.bf16.mxu0 0
        %1057 = vmatmul.mubr.bf16.gmra.mrb[0].mxu0 %v974
        %v1058 = vpop.f32.mrb[0].mxu0
        %v1059 = vadd.f32 0.0, %v1058
        %v1060 = vpop.f32.mrb[0].mxu0
        %v1061 = vpop.f32.mrb[0].mxu0
        %v1062 = vpop.f32.mrb[0].mxu0
        %1063 = vdwg.mxu0
        %v1064 = vpack.i.b16 %v498, %v498
        %v1065 = vlaneseq
        %v1066 = vshrl.u32 %v1065, 7
        %v1067 = vsub.s32 0, %v1066
        %v1068 = vrot.slane %v1064, %v1067
        %v1086 = vunpack.c.l.b16 %v427
        %v1087 = vunpack.c.l.b16 %v428
        %v1088 = vunpack.c.l.b16 %v429
        %v1089 = vunpack.c.l.b16 %v430
        %v1090 = vunpack.c.l.b16 %v431
        %v1091 = vunpack.c.l.b16 %v432
        %v1092 = vunpack.c.l.b16 %v433
        %v1093 = vunpack.c.l.b16 %v434
        %v1094 = vunpack.c.l.b16 %v435
        %v1095 = vunpack.c.l.b16 %v436
        %v1096 = vunpack.c.l.b16 %v437
        %v1097 = vunpack.c.l.b16 %v438
        %v1098 = vunpack.c.l.b16 %v439
        %v1099 = vunpack.c.l.b16 %v440
        %v1100 = vunpack.c.l.b16 %v441
        %v1101 = vunpack.c.l.b16 %v442
        %v1102 = vpack.c.b16 %v1087, %v1086
        %v1103 = vpack.c.b16 %v1089, %v1088
        %v1104 = vpack.c.b16 %v1091, %v1090
        %v1105 = vpack.c.b16 %v1093, %v1092
        %v1106 = vpack.c.b16 %v1095, %v1094
        %v1107 = vpack.c.b16 %v1097, %v1096
        %v1108 = vpack.c.b16 %v1099, %v1098
        %v1109 = vpack.c.b16 %v1101, %v1100
        %1118 = vmatprep.subr.bf16.mxu0 0
        %1119 = vmatpush1.bf16.msra.mxu0 %v1102
        %1120 = vmatprep.subr.bf16.mxu0 0
        %1121 = vmatpush1.bf16.msra.mxu0 %v1103
        %1122 = vmatprep.subr.bf16.mxu0 0
        %1123 = vmatpush1.bf16.msra.mxu0 %v1104
        %1124 = vmatprep.subr.bf16.mxu0 0
        %1125 = vmatpush1.bf16.msra.mxu0 %v1105
        %1126 = vmatprep.subr.bf16.mxu0 0
        %1127 = vmatpush1.bf16.msra.mxu0 %v1106
        %1128 = vmatprep.subr.bf16.mxu0 0
        %1129 = vmatpush1.bf16.msra.mxu0 %v1107
        %1130 = vmatprep.subr.bf16.mxu0 0
        %1131 = vmatpush1.bf16.msra.mxu0 %v1108
        %1132 = vmatprep.subr.bf16.mxu0 0
        %1133 = vmatpush1.bf16.msra.mxu0 %v1109
        %1134 = vmatprep.subr.bf16.mxu0 0
        %1135 = vmatpush1.bf16.msra.mxu0 0
        %1136 = vmatprep.subr.bf16.mxu0 0
        %1137 = vmatpush1.bf16.msra.mxu0 0
        %1138 = vmatprep.subr.bf16.mxu0 0
        %1139 = vmatpush1.bf16.msra.mxu0 0
        %1140 = vmatprep.subr.bf16.mxu0 0
        %1141 = vmatpush1.bf16.msra.mxu0 0
        %1142 = vmatprep.subr.bf16.mxu0 0
        %1143 = vmatpush1.bf16.msra.mxu0 0
        %1144 = vmatprep.subr.bf16.mxu0 0
        %1145 = vmatpush1.bf16.msra.mxu0 0
        %1146 = vmatprep.subr.bf16.mxu0 0
        %1147 = vmatpush1.bf16.msra.mxu0 0
        %1148 = vmatprep.subr.bf16.mxu0 0
        %1149 = vmatpush1.bf16.msra.mxu0 0
        %1150 = vmatprep.mubr.bf16.mxu0 0
        %1151 = vmatmul.mubr.bf16.gmra.mrb[0].mxu0 %v1068
        %v1152 = vpop.f32.mrb[0].mxu0
        %v1153 = vadd.f32 0.0, %v1152
        %v1154 = vpop.f32.mrb[0].mxu0
        %v1155 = vpop.f32.mrb[0].mxu0
        %v1156 = vpop.f32.mrb[0].mxu0
        %1157 = vdwg.mxu0
        %v1158 = vpack.i.b16 %v499, %v499
        %v1159 = vlaneseq
        %v1160 = vshrl.u32 %v1159, 7
        %v1161 = vsub.s32 0, %v1160
        %v1162 = vrot.slane %v1158, %v1161
        %v1180 = vunpack.c.l.b16 %v443
        %v1181 = vunpack.c.l.b16 %v444
        %v1182 = vunpack.c.l.b16 %v445
        %v1183 = vunpack.c.l.b16 %v446
        %v1184 = vunpack.c.l.b16 %v447
        %v1185 = vunpack.c.l.b16 %v448
        %v1186 = vunpack.c.l.b16 %v449
        %v1187 = vunpack.c.l.b16 %v450
        %v1188 = vunpack.c.l.b16 %v451
        %v1189 = vunpack.c.l.b16 %v452
        %v1190 = vunpack.c.l.b16 %v453
        %v1191 = vunpack.c.l.b16 %v454
        %v1192 = vunpack.c.l.b16 %v455
        %v1193 = vunpack.c.l.b16 %v456
        %v1194 = vunpack.c.l.b16 %v457
        %v1195 = vunpack.c.l.b16 %v458
        %v1196 = vpack.c.b16 %v1181, %v1180
        %v1197 = vpack.c.b16 %v1183, %v1182
        %v1198 = vpack.c.b16 %v1185, %v1184
        %v1199 = vpack.c.b16 %v1187, %v1186
        %v1200 = vpack.c.b16 %v1189, %v1188
        %v1201 = vpack.c.b16 %v1191, %v1190
        %v1202 = vpack.c.b16 %v1193, %v1192
        %v1203 = vpack.c.b16 %v1195, %v1194
        %1212 = vmatprep.subr.bf16.mxu0 0
        %1213 = vmatpush1.bf16.msra.mxu0 %v1196
        %1214 = vmatprep.subr.bf16.mxu0 0
        %1215 = vmatpush1.bf16.msra.mxu0 %v1197
        %1216 = vmatprep.subr.bf16.mxu0 0
        %1217 = vmatpush1.bf16.msra.mxu0 %v1198
        %1218 = vmatprep.subr.bf16.mxu0 0
        %1219 = vmatpush1.bf16.msra.mxu0 %v1199
        %1220 = vmatprep.subr.bf16.mxu0 0
        %1221 = vmatpush1.bf16.msra.mxu0 %v1200
        %1222 = vmatprep.subr.bf16.mxu0 0
        %1223 = vmatpush1.bf16.msra.mxu0 %v1201
        %1224 = vmatprep.subr.bf16.mxu0 0
        %1225 = vmatpush1.bf16.msra.mxu0 %v1202
        %1226 = vmatprep.subr.bf16.mxu0 0
        %1227 = vmatpush1.bf16.msra.mxu0 %v1203
        %1228 = vmatprep.subr.bf16.mxu0 0
        %1229 = vmatpush1.bf16.msra.mxu0 0
        %1230 = vmatprep.subr.bf16.mxu0 0
        %1231 = vmatpush1.bf16.msra.mxu0 0
        %1232 = vmatprep.subr.bf16.mxu0 0
        %1233 = vmatpush1.bf16.msra.mxu0 0
        %1234 = vmatprep.subr.bf16.mxu0 0
        %1235 = vmatpush1.bf16.msra.mxu0 0
        %1236 = vmatprep.subr.bf16.mxu0 0
        %1237 = vmatpush1.bf16.msra.mxu0 0
        %1238 = vmatprep.subr.bf16.mxu0 0
        %1239 = vmatpush1.bf16.msra.mxu0 0
        %1240 = vmatprep.subr.bf16.mxu0 0
        %1241 = vmatpush1.bf16.msra.mxu0 0
        %1242 = vmatprep.subr.bf16.mxu0 0
        %1243 = vmatpush1.bf16.msra.mxu0 0
        %1244 = vmatprep.mubr.bf16.mxu0 0
        %1245 = vmatmul.mubr.bf16.gmra.mrb[0].mxu0 %v1162
        %v1246 = vpop.f32.mrb[0].mxu0
        %v1247 = vadd.f32 0.0, %v1246
        %v1248 = vpop.f32.mrb[0].mxu0
        %v1249 = vpop.f32.mrb[0].mxu0
        %v1250 = vpop.f32.mrb[0].mxu0
        %1251 = vdwg.mxu0
        %v1252 = vadd.f32 %v459, %v589
        %v1253 = vadd.f32 %v460, %v683
        %v1254 = vadd.f32 %v461, %v777
        %v1255 = vadd.f32 %v462, %v871
        %v1256 = vadd.f32 %v463, %v965
        %v1257 = vadd.f32 %v464, %v1059
        %v1258 = vadd.f32 %v465, %v1153
        %v1259 = vadd.f32 %v466, %v1247
        %1260 = vst [vmem:[#allocation2] sm:$0x1] %v1252
        %1261 = vst [vmem:[#allocation2 + $0x1] sm:$0x1] %v1253
        %1262 = vst [vmem:[#allocation2 + $0x2] sm:$0x1] %v1254
        %1263 = vst [vmem:[#allocation2 + $0x3] sm:$0x1] %v1255
        %1264 = vst [vmem:[#allocation2 + $0x4] sm:$0x1] %v1256
        %1265 = vst [vmem:[#allocation2 + $0x5] sm:$0x1] %v1257
        %1266 = vst [vmem:[#allocation2 + $0x6] sm:$0x1] %v1258
        %1267 = vst [vmem:[#allocation2 + $0x7] sm:$0x1] %v1259
        %v1268 = vld [vmem:[#allocation3] sm:$0xff]
        %v1269 = vunpack.c.l.bf16 %v330
        %1270 = vadd.xlane.f32.xlu0 %v1269
        %v1271 = vpop.xlane.xlu0 %1270
        %v1272 = vadd.f32 %v1268, %v1271
        %vm1273 = vcmask 7168
        %1274 = vst.msk [vmem:[#allocation3] sm:$0xff] %vm1273, %v1272
        %p1275 = scmp.eq.s32.totalorder %s29, 1
        // Predicated region
        $region53: #{tpu_custom_call.1} parent=35 // pred_check
          %p1276 = pneg %p1275
        $region54: #{tpu_custom_call.1} parent=35 // pred_check_branch
          %1278 = sbr.rel (%p1276) target = $region56
        $region55: #{tpu_custom_call.1} parent=35 // pred_region
          %v1279 = vld [vmem:[#allocation3] sm:$0xff]
          %v1280 = vmax.f32 %v1279, 1e-09
          %v1281 = vrcp.pop %v1280
          %v1282 = vmul.f32 1.0, %v1281
          %vm1283 = vcmp.gt.f32.partialorder %v1279, 0.0
          %v1284 = vsel %vm1283, 1, 0
          %v1285 = vcvt.s32.f32 %v1284
          %v1286 = vld [vmem:[#allocation2] sm:$0x1]
          %v1287 = vld [vmem:[#allocation2 + $0x1] sm:$0x1]
          %v1288 = vld [vmem:[#allocation2 + $0x2] sm:$0x1]
          %v1289 = vld [vmem:[#allocation2 + $0x3] sm:$0x1]
          %v1290 = vld [vmem:[#allocation2 + $0x4] sm:$0x1]
          %v1291 = vld [vmem:[#allocation2 + $0x5] sm:$0x1]
          %v1292 = vld [vmem:[#allocation2 + $0x6] sm:$0x1]
          %v1293 = vld [vmem:[#allocation2 + $0x7] sm:$0x1]
          %1295 = vset.pattern.permute.xlu0 0
          %1296 = vperm.xlu0 %1295, %v1282
          %v1297 = vpop.permute.xlu0 %1296
          %v1298 = vlaneseq
          %v1299 = vshrl.u32 %v1298, 7
          %v1300 = vsub.s32 0, %v1299
          %v1301 = vrot.slane %v1297, %v1300
          %v1302 = vlaneseq
          %v1303 = vshrl.u32 %v1302, 7
          %v1304 = vsub.s32 1, %v1303
          %v1305 = vrot.slane %v1297, %v1304
          %v1306 = vlaneseq
          %v1307 = vshrl.u32 %v1306, 7
          %v1308 = vsub.s32 2, %v1307
          %v1309 = vrot.slane %v1297, %v1308
          %v1310 = vlaneseq
          %v1311 = vshrl.u32 %v1310, 7
          %v1312 = vsub.s32 3, %v1311
          %v1313 = vrot.slane %v1297, %v1312
          %v1314 = vlaneseq
          %v1315 = vshrl.u32 %v1314, 7
          %v1316 = vsub.s32 4, %v1315
          %v1317 = vrot.slane %v1297, %v1316
          %v1318 = vlaneseq
          %v1319 = vshrl.u32 %v1318, 7
          %v1320 = vsub.s32 5, %v1319
          %v1321 = vrot.slane %v1297, %v1320
          %v1322 = vlaneseq
          %v1323 = vshrl.u32 %v1322, 7
          %v1324 = vsub.s32 6, %v1323
          %v1325 = vrot.slane %v1297, %v1324
          %v1326 = vlaneseq
          %v1327 = vshrl.u32 %v1326, 7
          %v1328 = vsub.s32 7, %v1327
          %v1329 = vrot.slane %v1297, %v1328
          %v1338 = vmul.f32 %v1286, %v1301
          %v1339 = vmul.f32 %v1287, %v1305
          %v1340 = vmul.f32 %v1288, %v1309
          %v1341 = vmul.f32 %v1289, %v1313
          %v1342 = vmul.f32 %v1290, %v1317
          %v1343 = vmul.f32 %v1291, %v1321
          %v1344 = vmul.f32 %v1292, %v1325
          %v1345 = vmul.f32 %v1293, %v1329
          %v1346 = vld [vmem:[#allocation9] sm:$0xff]
          %v1347 = vld [vmem:[#allocation9 + $0x8] sm:$0xff]
          %v1348 = vld [vmem:[#allocation9 + $0x10] sm:$0xff]
          %v1349 = vld [vmem:[#allocation9 + $0x18] sm:$0xff]
          %v1350 = vld [vmem:[#allocation9 + $0x20] sm:$0xff]
          %v1351 = vld [vmem:[#allocation9 + $0x28] sm:$0xff]
          %v1352 = vld [vmem:[#allocation9 + $0x30] sm:$0xff]
          %v1353 = vld [vmem:[#allocation9 + $0x38] sm:$0xff]
          %v1354 = vld [vmem:[#allocation9 + $0x40] sm:$0xff]
          %v1355 = vld [vmem:[#allocation9 + $0x48] sm:$0xff]
          %v1356 = vld [vmem:[#allocation9 + $0x50] sm:$0xff]
          %v1357 = vld [vmem:[#allocation9 + $0x58] sm:$0xff]
          %v1358 = vld [vmem:[#allocation9 + $0x60] sm:$0xff]
          %v1359 = vld [vmem:[#allocation9 + $0x68] sm:$0xff]
          %v1360 = vld [vmem:[#allocation9 + $0x70] sm:$0xff]
          %v1361 = vld [vmem:[#allocation9 + $0x78] sm:$0xff]
          %v1362 = vld [vmem:[%s3] sm:$0x1]
          %v1364 = vlaneseq
          %v1365 = vshrl.u32 %v1364, 7
          %v1366 = vsub.s32 0, %v1365
          %v1367 = vrot.slane %v1362, %v1366
          %1370 = vset.pattern.permute.xlu0 0
          %1371 = vperm.xlu0 %1370, %v1285
          %v1372 = vpop.permute.xlu0 %1371
          %v1374 = vmul.f32 %v1367, %v1372
          %v1383 = vcombine.low %v1338, %v1339
          %v1384 = vcombine.low %v1340, %v1341
          %v1385 = vcombine.low %v1342, %v1343
          %v1386 = vcombine.low %v1344, %v1345
          %v1388 = vunpack.c.l.s4 1966171168
          %v1389 = vunpack.c.0.s8 %v1388
          %v1390 = vlaneseq
          %v1391 = vshrl.u32 %v1390, 7
          %v1392 = vsub.s32 %v1389, %v1391
          %v1393 = vrot.slane %v1383, %v1392
          %v1395 = vunpack.c.l.s4 1966171168
          %v1396 = vunpack.c.0.s8 %v1395
          %v1397 = vlaneseq
          %v1398 = vshrl.u32 %v1397, 7
          %v1399 = vsub.s32 %v1396, %v1398
          %v1400 = vrot.slane %v1384, %v1399
          %v1402 = vunpack.c.l.s4 1966171168
          %v1403 = vunpack.c.0.s8 %v1402
          %v1404 = vlaneseq
          %v1405 = vshrl.u32 %v1404, 7
          %v1406 = vsub.s32 %v1403, %v1405
          %v1407 = vrot.slane %v1385, %v1406
          %v1409 = vunpack.c.l.s4 1966171168
          %v1410 = vunpack.c.0.s8 %v1409
          %v1411 = vlaneseq
          %v1412 = vshrl.u32 %v1411, 7
          %v1413 = vsub.s32 %v1410, %v1412
          %v1414 = vrot.slane %v1386, %v1413
          %v1415 = vcombine.low %v1393, %v1400
          %v1416 = vcombine.low %v1407, %v1414
          %v1418 = vunpack.c.l.s4 1966171168
          %v1419 = vunpack.c.0.s8 %v1418
          %v1420 = vlaneseq
          %v1421 = vshrl.u32 %v1420, 7
          %v1422 = vsub.s32 %v1419, %v1421
          %v1423 = vrot.slane %v1415, %v1422
          %v1425 = vunpack.c.l.s4 1966171168
          %v1426 = vunpack.c.0.s8 %v1425
          %v1427 = vlaneseq
          %v1428 = vshrl.u32 %v1427, 7
          %v1429 = vsub.s32 %v1426, %v1428
          %v1430 = vrot.slane %v1416, %v1429
          %v1431 = vcombine.low %v1423, %v1430
          %1433 = vmatprep.subr.mxu0 0.0
          %1434 = vmatpush1.msra.mxu0 %v1346
          %1435 = vmatprep.subr.mxu0 0.0
          %1436 = vmatpush1.msra.mxu0 %v1347
          %1437 = vmatprep.subr.mxu0 0.0
          %1438 = vmatpush1.msra.mxu0 %v1348
          %1439 = vmatprep.subr.mxu0 0.0
          %1440 = vmatpush1.msra.mxu0 %v1349
          %1441 = vmatprep.subr.mxu0 0.0
          %1442 = vmatpush1.msra.mxu0 %v1350
          %1443 = vmatprep.subr.mxu0 0.0
          %1444 = vmatpush1.msra.mxu0 %v1351
          %1445 = vmatprep.subr.mxu0 0.0
          %1446 = vmatpush1.msra.mxu0 %v1352
          %1447 = vmatprep.subr.mxu0 0.0
          %1448 = vmatpush1.msra.mxu0 %v1353
          %1449 = vmatprep.subr.mxu0 0.0
          %1450 = vmatpush1.msra.mxu0 %v1354
          %1451 = vmatprep.subr.mxu0 0.0
          %1452 = vmatpush1.msra.mxu0 %v1355
          %1453 = vmatprep.subr.mxu0 0.0
          %1454 = vmatpush1.msra.mxu0 %v1356
          %1455 = vmatprep.subr.mxu0 0.0
          %1456 = vmatpush1.msra.mxu0 %v1357
          %1457 = vmatprep.subr.mxu0 0.0
          %1458 = vmatpush1.msra.mxu0 %v1358
          %1459 = vmatprep.subr.mxu0 0.0
          %1460 = vmatpush1.msra.mxu0 %v1359
          %1461 = vmatprep.subr.mxu0 0.0
          %1462 = vmatpush1.msra.mxu0 %v1360
          %1463 = vmatprep.subr.mxu0 0.0
          %1464 = vmatpush1.msra.mxu0 %v1361
          %1465 = vmatprep.subr.mxu0 0.0
          %1466 = vmatpush1.msra.mxu0 0.0
          %1467 = vmatprep.subr.mxu0 0.0
          %1468 = vmatpush1.msra.mxu0 0.0
          %1469 = vmatprep.subr.mxu0 0.0
          %1470 = vmatpush1.msra.mxu0 0.0
          %1471 = vmatprep.subr.mxu0 0.0
          %1472 = vmatpush1.msra.mxu0 0.0
          %1473 = vmatprep.subr.mxu0 0.0
          %1474 = vmatpush1.msra.mxu0 0.0
          %1475 = vmatprep.subr.mxu0 0.0
          %1476 = vmatpush1.msra.mxu0 0.0
          %1477 = vmatprep.subr.mxu0 0.0
          %1478 = vmatpush1.msra.mxu0 0.0
          %1479 = vmatprep.subr.mxu0 0.0
          %1480 = vmatpush1.msra.mxu0 0.0
          %1481 = vmatprep.subr.mxu0 0.0
          %1482 = vmatpush1.msra.mxu0 0.0
          %1483 = vmatprep.subr.mxu0 0.0
          %1484 = vmatpush1.msra.mxu0 0.0
          %1485 = vmatprep.subr.mxu0 0.0
          %1486 = vmatpush1.msra.mxu0 0.0
          %1487 = vmatprep.subr.mxu0 0.0
          %1488 = vmatpush1.msra.mxu0 0.0
          %1489 = vmatprep.subr.mxu0 0.0
          %1490 = vmatpush1.msra.mxu0 0.0
          %1491 = vmatprep.subr.mxu0 0.0
          %1492 = vmatpush1.msra.mxu0 0.0
          %1493 = vmatprep.subr.mxu0 0.0
          %1494 = vmatpush1.msra.mxu0 0.0
          %1495 = vmatprep.subr.mxu0 0.0
          %1496 = vmatpush1.msra.mxu0 0.0
          %1497 = vmatprep.mubr.f32.mxu0 0.0
          %1498 = vmatmul.mubr.f32.gmra.mrb[0].mxu0 %v1431
          %v1499 = vpop.f32.mrb[0].mxu0
          %v1500 = vadd.f32 %v1374, %v1499
          %v1501 = vpop.f32.mrb[0].mxu0
          %1502 = vdwg.mxu0
          %1503 = vst [vmem:[%s312] sm:$0xff] %v1500
        $region56: #{tpu_custom_call.1} parent=35 // pred_fallthru
          _
        %s1504 = sand.u32 %s142, 1
        %s1505 = scalar_lea.sflag [#allocation6], %s1504
        %s1506 = sand.u32 %s142, 1
        %s1507 = smul.addr %s1506, 8
        %s1508 = scalar_lea.vmem [#allocation10], %s1507
        // Predicated region
        $region57: #{tpu_custom_call.1} parent=35 // pred_check
          %p1509 = pneg %p152
        $region58: #{tpu_custom_call.1} parent=35 // pred_check_branch
          %1511 = sbr.rel (%p1509) target = $region60
        $region59: #{tpu_custom_call.1} parent=35 // pred_region
          %s1513 = ssub.s32 128, 128
          %1514 = vsyncadd %s1505, %s1513
          %s1515 = smul.addr %s28, 128
          %s1516 = scalar_lea.hbm %s4, %s1515
          %s1518 = sshll.u32 %s1508, 4
          %s1519 = int_to_ptr.vmem [resolvable:$true] %s1518
          %1521 = dma.vmem_to_hbm [thread:$0]  %s1519, 128, %s1516, %s1505
        $region60: #{tpu_custom_call.1} parent=35 // pred_fallthru
          _
      $region36: #{tpu_custom_call.1} parent=5 // pred_fallthru
        _
      %p1522 = scmp.le.s32.totalorder 2, %s19
      // Predicated region
      $region61: #{tpu_custom_call.1} parent=5 // pred_check
        %p1523 = pneg %p1522
      $region62: #{tpu_custom_call.1} parent=5 // pred_check_branch
        %1525 = sbr.rel (%p1523) target = $region64
      $region63: #{tpu_custom_call.1} parent=5 // pred_region
        %s1526 = ssub.s32 %s19, 2
        // Predicated region
        $region65: #{tpu_custom_call.1} parent=63 // pred_check
          %p1527 = pneg %p158
        $region66: #{tpu_custom_call.1} parent=63 // pred_check_branch
          %1529 = sbr.rel (%p1527) target = $region68
        $region67: #{tpu_custom_call.1} parent=63 // pred_region
          %s1530 = sand.u32 %s143, 1
          %s1531 = scalar_lea.sflag [#allocation6], %s1530
          %s1532 = sand.u32 %s143, 1
          %s1533 = smul.addr %s1532, 8
          %s1534 = scalar_lea.vmem [#allocation10], %s1533
          %1535 = dma.done %s1531, 128
        $region68: #{tpu_custom_call.1} parent=63 // pred_fallthru
          _
      $region64: #{tpu_custom_call.1} parent=5 // pred_fallthru
        _
    $region6: #{tpu_custom_call.1} parent=1 // loop_footer
      %s23 = sadd.s32 1, %s19
    $region7: #{tpu_custom_call.1} parent=1 // loop_footer_branch
      %18 = sbr.rel target = $region3
    $region8: #{tpu_custom_call.1} parent=1 // loop_exit
      _
    %1536 = vsyncpa [#allocation5], 1
    %s1537 = scalar_lea.sflag [#allocation5], 1
    %1538 = vsyncpa %s1537, 1
    %1539 = vsyncpa [#allocation8], 1
    %s1540 = scalar_lea.sflag [#allocation8], 1
    %1541 = vsyncpa %s1540, 1
    %1542 = vsyncpa [#allocation6], 1
    %s1543 = scalar_lea.sflag [#allocation6], 1
    %1544 = vsyncpa %s1543, 1

</llo_original>
